<compile_context>
chip_gen: v7x
topology: tpu7x:2x2x1
jax: 0.10.0
libtpu: 0.0.40
codegen_flags: <defaults>
</compile_context>

<pallas_src>
import jax
import jax.numpy as jnp
import numpy as np
from jax.experimental import pallas as pl
from jax.experimental.pallas import tpu as pltpu


# ---------------------------------------------------------------------------
# Fused kernel: visual MLP + audio mask prediction + complex mask application
# + audio_gt crop copy-through.  One grid step handles Bt batch rows.
# ---------------------------------------------------------------------------
def _fused_av_kernel(frames_ref, w1_ref, b1_ref, w2t_ref, b2_ref,
                     mix_ref, diff_ref, wm_ref, bm_ref,
                     mask_ref, binaural_ref, gt_ref):
    FmT = mix_ref.shape[2]

    # ---- synthetic net_visual: flatten -> matmul -> ReLU -> 2-wide projection
    x = frames_ref[...]                                        # (Bt, K)
    # TODO(synk): for realistic K (e.g. 3*224*224) add a trailing "arbitrary"
    # K grid axis streaming bf16 (Bt, tk) x (tk, D) tiles into an f32 VMEM
    # accumulator (init/finalize with pl.when, pipeline_mode=pl.Buffered(3) on
    # the w1 K-tiles); kept as a monolithic f32 matmul here at small K.
    h = jnp.dot(x, w1_ref[...], preferred_element_type=jnp.float32)
    h = jnp.maximum(h + b1_ref[...], 0.0)                      # (Bt, D)

    # Degenerate N=2 projection on the VPU/XLU (broadcast mul + lane reduce)
    # instead of a near-empty MXU pass + 2-lane masked store.
    w2t = w2t_ref[...]                                         # (2, D)
    v0 = jnp.sum(h * w2t[0:1, :], axis=-1, keepdims=True)      # (Bt, 1)
    v1 = jnp.sum(h * w2t[1:2, :], axis=-1, keepdims=True)      # (Bt, 1)

    # Hoisted per-row constants: projection bias + mask bias folded in once.
    c0 = v0 + (b2_ref[0, 0] + bm_ref[0, 0])                    # (Bt, 1)
    c1 = v1 + (b2_ref[0, 1] + bm_ref[0, 1])                    # (Bt, 1)

    # ---- synthetic net_audio + complex mask application (lane-dense planes)
    mr = mix_ref[:, 0, :]                                      # (Bt, FmT)
    mi = mix_ref[:, 1, :]

    w00 = wm_ref[0, 0]
    w01 = wm_ref[0, 1]
    w10 = wm_ref[1, 0]
    w11 = wm_ref[1, 1]

    mask_r = jnp.tanh(w00 * mr + w01 * mi + c0)
    mask_i = jnp.tanh(w10 * mr + w11 * mi + c1)

    odt = mask_ref.dtype
    # Lane-dense stores: channel folded into trailing axis, both halves are
    # 128-aligned static slices of a (Bt, 2*FmT) block.
    mask_ref[:, :FmT] = mask_r.astype(odt)
    mask_ref[:, FmT:] = mask_i.astype(odt)
    # complex mask application (exact semantics of the PyTorch forward)
    binaural_ref[:, :FmT] = (mr * mask_r - mi * mask_i).astype(odt)
    binaural_ref[:, FmT:] = (mr * mask_i + mi * mask_r).astype(odt)

    # audio_gt = audio_diff[:, :, :-1, :] copy-through (crop done by BlockSpec)
    gdt = gt_ref.dtype
    gt_ref[:, :FmT] = diff_ref[:, 0, :].astype(gdt)
    gt_ref[:, FmT:] = diff_ref[:, 1, :].astype(gdt)


# ---------------------------------------------------------------------------
# Hardware / tiling helpers
# ---------------------------------------------------------------------------
def _vmem_capacity_bytes():
    try:
        return int(pltpu.get_tpu_info().vmem_capacity_bytes)
    except Exception:
        return 64 * 1024 * 1024   # conservative: v7x per-TensorCore VMEM


def _is_v7x():
    try:
        kind = jax.devices()[0].device_kind.lower()
        return ("v7" in kind) or ("7x" in kind)
    except Exception:
        return False


def _pick_batch_tile(B, per_sample_vmem, per_sample_hbm, budget_bytes,
                     prefer_split):
    """Largest batch tile (multiple of 8 when B allows) fitting the VMEM budget.

    On v7x only, prefer >= 2 grid steps so both TensorCores get work — but
    never push Bt below 8 and never when a step would move < 512 KiB of HBM
    (the ~0.35 us/step fixed overhead would dominate)."""
    if B >= 8:
        cands = [d for d in range(8, B + 1, 8) if B % d == 0]
        if not cands:
            cands = [d for d in range(1, B + 1) if B % d == 0]
    else:
        cands = [d for d in range(1, B + 1) if B % d == 0]
    fits = [d for d in cands if d * per_sample_vmem <= budget_bytes] or [min(cands)]
    best = max(fits)
    if prefer_split:
        split = [d for d in fits
                 if B // d >= 2 and d * per_sample_hbm >= (512 << 10)]
        if split:
            best = max(split)
    return best


# ---------------------------------------------------------------------------
# AudioVisualModel forward
# ---------------------------------------------------------------------------
def audio_visual_model_forward(inputs, params, out_dtype=jnp.float32):
    # out_dtype=jnp.bfloat16 halves mask/binaural HBM writeback (the store slot
    # is the binding unit on v5e) if downstream tolerates it; in-kernel math is
    # always f32.  Default stays f32 so the exactness asserts below hold.
    frame = inputs["frame"]                 # (B, 3, H, W)
    audio_diff = inputs["audio_diff_spec"]  # (B, 2, F, T)
    audio_mix = inputs["audio_mix_spec"]    # (B, 2, F, T)

    B, C, F, T = audio_mix.shape
    assert C == 2
    Fm = F - 1
    FmT = Fm * T
    # TODO(synk): padded/masked fallback when (F-1)*T is not a multiple of 128.
    assert FmT % 128 == 0, "lane-dense layout needs (F-1)*T to be a multiple of 128"

    K = int(np.prod(frame.shape[1:]))
    D = params["w1"].shape[1]

    # Free (metadata-only) reshapes — no HBM pass, unlike an XLA slice.
    frames_flat = frame.reshape(B, K).astype(jnp.float32)          # (B, K)
    mix_flat = audio_mix.reshape(B, 2, F * T).astype(jnp.float32)   # (B, 2, F*T)
    diff_flat = audio_diff.reshape(B, 2, F * T)                      # (B, 2, F*T)
    w2t = jnp.transpose(params["w2"])                                # (2, D), tiny

    out_b = np.dtype(out_dtype).itemsize
    gt_dtype = audio_diff.dtype
    gt_b = np.dtype(gt_dtype).itemsize

    # ---- generation-aware VMEM budget and batch-tile selection -------------
    vmem_limit = int(_vmem_capacity_bytes() * 0.7)     # ~89 MiB v5e/v6e, ~45 MiB v7x
    # Per batch row, per pipeline stage (x2 double-buffering):
    #   frames row + mix/diff blocks (2->8 sublane pad on the channel axis)
    #   + three lane-dense output planes of 2*FmT.
    per_sample_vmem = 2 * (K * 4
                           + 2 * (8 * FmT * 4)
                           + 2 * FmT * (2 * out_b + gt_b))
    per_sample_hbm = (K * 4 + 2 * (2 * FmT * 4)
                      + 2 * FmT * (2 * out_b + gt_b))
    resident = 2 * (K * D + 3 * D) * 4 + 4096          # w1/b1/w2t (+ slack)
    budget = max(int(0.45 * vmem_limit) - resident, per_sample_vmem)

    Bt = _pick_batch_tile(B, per_sample_vmem, per_sample_hbm, budget,
                          prefer_split=_is_v7x())
    grid = (B // Bt,)

    # Advisory cost for XLA's scheduler.
    flops = 2 * B * K * D + 4 * B * D + 16 * B * FmT
    transcendentals = 2 * B * FmT
    bytes_accessed = (B * K * 4 + K * D * 4
                      + B * 2 * FmT * 4 * 2                 # mix + diff reads (crop)
                      + B * 2 * FmT * (2 * out_b + gt_b))   # 3 output slabs

    out_shape = (
        jax.ShapeDtypeStruct((B, 2 * FmT), out_dtype),   # mask
        jax.ShapeDtypeStruct((B, 2 * FmT), out_dtype),   # binaural
        jax.ShapeDtypeStruct((B, 2 * FmT), gt_dtype),    # audio_gt copy-through
    )

    # NOTE: the [:, :, :-1, :] crop of mix/diff is expressed by taking block 0
    # of size FmT on the flattened F*T axis.  This is only correct because the
    # grid never indexes block > 0 on that axis (the trailing T elements of the
    # last F row are never touched) — do not extend the grid over that axis.
    mask_flat, binaural_flat, gt_flat = pl.pallas_call(
        _fused_av_kernel,
        out_shape=out_shape,
        grid=grid,
        in_specs=[
            pl.BlockSpec((Bt, K), lambda b: (b, 0)),            # frames (lane-dense)
            pl.BlockSpec((K, D), lambda b: (0, 0)),             # w1 (resident)
            pl.BlockSpec((1, D), lambda b: (0, 0)),             # b1
            pl.BlockSpec((2, D), lambda b: (0, 0)),             # w2^T
            pl.BlockSpec(memory_space=pltpu.MemorySpace.SMEM),  # b2 scalars
            pl.BlockSpec((Bt, 2, FmT), lambda b: (b, 0, 0)),    # audio_mix (cropped)
            pl.BlockSpec((Bt, 2, FmT), lambda b: (b, 0, 0)),    # audio_diff (cropped)
            pl.BlockSpec(memory_space=pltpu.MemorySpace.SMEM),  # w_mask scalars
            pl.BlockSpec(memory_space=pltpu.MemorySpace.SMEM),  # b_mask scalars
        ],
        out_specs=(
            pl.BlockSpec((Bt, 2 * FmT), lambda b: (b, 0)),      # mask (lane-dense)
            pl.BlockSpec((Bt, 2 * FmT), lambda b: (b, 0)),      # binaural
            pl.BlockSpec((Bt, 2 * FmT), lambda b: (b, 0)),      # audio_gt
        ),
        compiler_params=pltpu.CompilerParams(
            dimension_semantics=("parallel",),
            vmem_limit_bytes=vmem_limit,
        ),
        cost_estimate=pl.CostEstimate(
            flops=int(flops),
            transcendentals=int(transcendentals),
            bytes_accessed=int(bytes_accessed),
        ),
    )(frames_flat, params["w1"], params["b1"], w2t, params["b2"],
      mix_flat, diff_flat, params["w_mask"], params["b_mask"])

    # Free reshapes back to the module's NCHW-style (B, 2, F-1, T) layout.
    mask_prediction = mask_flat.reshape(B, 2, Fm, T)
    binaural_output = binaural_flat.reshape(B, 2, Fm, T)
    audio_gt = gt_flat.reshape(B, 2, Fm, T)

    return {
        "mask_prediction": mask_prediction,
        "binaural_output": binaural_output,
        "audio_gt": audio_gt,
    }


# ---------------------------------------------------------------------------
# Pure-JAX reference (correctness check of the Pallas path)
# ---------------------------------------------------------------------------
def reference_forward(inputs, params):
    frame = inputs["frame"]
    audio_diff = inputs["audio_diff_spec"]
    audio_mix = inputs["audio_mix_spec"]
    B = frame.shape[0]
    x = frame.reshape(B, -1).astype(jnp.float32)
    h = jnp.maximum(x @ params["w1"] + params["b1"], 0.0)
    vproj = h @ params["w2"] + params["b2"]          # (B, 2)
    mix = audio_mix[:, :, :-1, :].astype(jnp.float32)
    mr, mi = mix[:, 0], mix[:, 1]
    w, b = params["w_mask"], params["b_mask"]
    mask_r = jnp.tanh(w[0, 0] * mr + w[0, 1] * mi + b[0, 0] + vproj[:, 0, None, None])
    mask_i = jnp.tanh(w[1, 0] * mr + w[1, 1] * mi + b[0, 1] + vproj[:, 1, None, None])
    mask = jnp.stack([mask_r, mask_i], axis=1)
    out_r = mr * mask_r - mi * mask_i
    out_i = mr * mask_i + mi * mask_r
    binaural = jnp.stack([out_r, out_i], axis=1)
    return {
        "mask_prediction": mask,
        "binaural_output": binaural,
        "audio_gt": audio_diff[:, :, :-1, :],
    }


if __name__ == "__main__":
    key = jax.random.PRNGKey(0)
    k_frame, k_diff, k_mix, k_w1, k_w2, k_wm = jax.random.split(key, 6)

    # Small shapes consistent with the module's forward.  B is a multiple of 8
    # so the batch tile fills the f32 sublanes; D padded to 128 lanes.
    B, H, W = 8, 16, 16          # visual frames (B, 3, H, W)
    F, T = 17, 16                # spectrograms (B, 2, F, T); (F-1)*T = 256
    D = 128                      # synthetic visual hidden width (lane-padded)
    K = 3 * H * W

    inputs = {
        "frame": jax.random.normal(k_frame, (B, 3, H, W), dtype=jnp.float32),
        "audio_diff_spec": jax.random.normal(k_diff, (B, 2, F, T), dtype=jnp.float32),
        "audio_mix_spec": jax.random.normal(k_mix, (B, 2, F, T), dtype=jnp.float32),
    }

    # Deterministic synthetic parameters for net_visual / net_audio.
    params = {
        "w1": jax.random.normal(k_w1, (K, D), dtype=jnp.float32) * 0.02,
        "b1": jnp.zeros((1, D), dtype=jnp.float32),
        "w2": jax.random.normal(k_w2, (D, 2), dtype=jnp.float32) * 0.1,
        "b2": jnp.zeros((1, 2), dtype=jnp.float32),
        "w_mask": jax.random.normal(k_wm, (2, 2), dtype=jnp.float32) * 0.5,
        "b_mask": jnp.zeros((1, 2), dtype=jnp.float32),
    }

    out = audio_visual_model_forward(inputs, params)
    jax.block_until_ready(out)

    ref = reference_forward(inputs, params)
    np.testing.assert_allclose(
        np.asarray(out["mask_prediction"]), np.asarray(ref["mask_prediction"]),
        rtol=1e-3, atol=1e-3)
    np.testing.assert_allclose(
        np.asarray(out["binaural_output"]), np.asarray(ref["binaural_output"]),
        rtol=1e-3, atol=1e-3)
    np.testing.assert_allclose(
        np.asarray(out["audio_gt"]), np.asarray(ref["audio_gt"]), rtol=0, atol=0)

    print("KERNEL_OK")
</pallas_src>

<mosaic_0001>
module attributes {stable_mosaic.version = 11 : i64} {
  func.func @_fused_av_kernel(%arg0: i32, %arg1: memref<8x768xf32, #tpu.memory_space<vmem>>, %arg2: memref<768x128xf32, #tpu.memory_space<vmem>>, %arg3: memref<1x128xf32, #tpu.memory_space<vmem>>, %arg4: memref<2x128xf32, #tpu.memory_space<vmem>>, %arg5: memref<1x2xf32, #tpu.memory_space<smem>>, %arg6: memref<8x2x256xf32, #tpu.memory_space<vmem>>, %arg7: memref<8x2x256xf32, #tpu.memory_space<vmem>>, %arg8: memref<2x2xf32, #tpu.memory_space<smem>>, %arg9: memref<1x2xf32, #tpu.memory_space<smem>>, %arg10: memref<8x512xf32, #tpu.memory_space<vmem>>, %arg11: memref<8x512xf32, #tpu.memory_space<vmem>>, %arg12: memref<8x512xf32, #tpu.memory_space<vmem>>) attributes {dimension_semantics = [#tpu.dimension_semantics<parallel>], iteration_bounds = array<i64: 1>, scalar_prefetch = 0 : i64, scratch_operands = 0 : i64, tpu.core_type = #tpu.core_type<tc>, window_params = [{transform_indices = @transform_0, window_bounds = array<i64: 8, 768>}, {pipeline_mode = #tpu.pipeline_mode<synchronous>, transform_indices = @transform_1, window_bounds = array<i64: 768, 128>}, {pipeline_mode = #tpu.pipeline_mode<synchronous>, transform_indices = @transform_2, window_bounds = array<i64: 1, 128>}, {pipeline_mode = #tpu.pipeline_mode<synchronous>, transform_indices = @transform_3, window_bounds = array<i64: 2, 128>}, {transform_indices = @transform_4, window_bounds = array<i64: 1, 2>}, {transform_indices = @transform_5, window_bounds = array<i64: 8, 2, 256>}, {transform_indices = @transform_6, window_bounds = array<i64: 8, 2, 256>}, {transform_indices = @transform_7, window_bounds = array<i64: 2, 2>}, {transform_indices = @transform_8, window_bounds = array<i64: 1, 2>}, {transform_indices = @transform_9, window_bounds = array<i64: 8, 512>}, {transform_indices = @transform_10, window_bounds = array<i64: 8, 512>}, {transform_indices = @transform_11, window_bounds = array<i64: 8, 512>}]} {
    %c0 = arith.constant 0 : index
    %c0_0 = arith.constant 0 : index
    %0 = vector.load %arg1[%c0, %c0_0] : memref<8x768xf32, #tpu.memory_space<vmem>>, vector<8x768xf32>
    %c0_1 = arith.constant 0 : index
    %c0_2 = arith.constant 0 : index
    %1 = vector.load %arg2[%c0_1, %c0_2] : memref<768x128xf32, #tpu.memory_space<vmem>>, vector<768x128xf32>
    %cst = arith.constant dense<0.000000e+00> : vector<8x128xf32>
    %2 = tpu.matmul %0, %1, %cst {dimension_numbers = #tpu.dot_dimension_numbers<[1], [0], [0], [1], [0, 0, 1, 1], [], []>} : vector<8x768xf32>, vector<768x128xf32>, vector<8x128xf32> -> vector<8x128xf32>
    %c0_3 = arith.constant 0 : index
    %c0_4 = arith.constant 0 : index
    %3 = vector.load %arg3[%c0_3, %c0_4] : memref<1x128xf32, #tpu.memory_space<vmem>>, vector<1x128xf32>
    %4 = vector.broadcast %3 : vector<1x128xf32> to vector<8x128xf32>
    %5 = arith.addf %2, %4 : vector<8x128xf32>
    %cst_5 = arith.constant 0.000000e+00 : f32
    %6 = vector.broadcast %cst_5 : f32 to vector<8x128xf32>
    %7 = arith.maximumf %5, %6 : vector<8x128xf32>
    %c0_6 = arith.constant 0 : index
    %c0_7 = arith.constant 0 : index
    %8 = vector.load %arg4[%c0_6, %c0_7] : memref<2x128xf32, #tpu.memory_space<vmem>>, vector<2x128xf32>
    %9 = vector.extract_strided_slice %8 {offsets = [0, 0], sizes = [1, 128], strides = [1, 1]} : vector<2x128xf32> to vector<1x128xf32>
    %10 = vector.broadcast %9 : vector<1x128xf32> to vector<8x128xf32>
    %11 = arith.mulf %7, %10 : vector<8x128xf32>
    %cst_8 = arith.constant dense<0.000000e+00> : vector<8xf32>
    %12 = vector.multi_reduction <add>, %11, %cst_8 [1] : vector<8x128xf32> to vector<8xf32>
    %13 = vector.shape_cast %12 : vector<8xf32> to vector<8x1xf32>
    %14 = vector.extract_strided_slice %8 {offsets = [1, 0], sizes = [1, 128], strides = [1, 1]} : vector<2x128xf32> to vector<1x128xf32>
    %15 = vector.broadcast %14 : vector<1x128xf32> to vector<8x128xf32>
    %16 = arith.mulf %7, %15 : vector<8x128xf32>
    %cst_9 = arith.constant dense<0.000000e+00> : vector<8xf32>
    %17 = vector.multi_reduction <add>, %16, %cst_9 [1] : vector<8x128xf32> to vector<8xf32>
    %18 = vector.shape_cast %17 : vector<8xf32> to vector<8x1xf32>
    %c0_10 = arith.constant 0 : index
    %c0_11 = arith.constant 0 : index
    %19 = memref.load %arg5[%c0_10, %c0_11] : memref<1x2xf32, #tpu.memory_space<smem>>
    %c0_12 = arith.constant 0 : index
    %c0_13 = arith.constant 0 : index
    %20 = memref.load %arg9[%c0_12, %c0_13] : memref<1x2xf32, #tpu.memory_space<smem>>
    %21 = arith.addf %19, %20 : f32
    %22 = vector.broadcast %21 : f32 to vector<8x1xf32>
    %23 = arith.addf %13, %22 : vector<8x1xf32>
    %c0_14 = arith.constant 0 : index
    %c1 = arith.constant 1 : index
    %24 = memref.load %arg5[%c0_14, %c1] : memref<1x2xf32, #tpu.memory_space<smem>>
    %c0_15 = arith.constant 0 : index
    %c1_16 = arith.constant 1 : index
    %25 = memref.load %arg9[%c0_15, %c1_16] : memref<1x2xf32, #tpu.memory_space<smem>>
    %26 = arith.addf %24, %25 : f32
    %27 = vector.broadcast %26 : f32 to vector<8x1xf32>
    %28 = arith.addf %18, %27 : vector<8x1xf32>
    %c0_17 = arith.constant 0 : index
    %c0_18 = arith.constant 0 : index
    %c0_19 = arith.constant 0 : index
    %29 = vector.load %arg6[%c0_17, %c0_18, %c0_19] : memref<8x2x256xf32, #tpu.memory_space<vmem>>, vector<8x1x256xf32>
    %30 = vector.shape_cast %29 : vector<8x1x256xf32> to vector<8x256xf32>
    %c0_20 = arith.constant 0 : index
    %c1_21 = arith.constant 1 : index
    %c0_22 = arith.constant 0 : index
    %31 = vector.load %arg6[%c0_20, %c1_21, %c0_22] : memref<8x2x256xf32, #tpu.memory_space<vmem>>, vector<8x1x256xf32>
    %32 = vector.shape_cast %31 : vector<8x1x256xf32> to vector<8x256xf32>
    %c0_23 = arith.constant 0 : index
    %c0_24 = arith.constant 0 : index
    %33 = memref.load %arg8[%c0_23, %c0_24] : memref<2x2xf32, #tpu.memory_space<smem>>
    %c0_25 = arith.constant 0 : index
    %c1_26 = arith.constant 1 : index
    %34 = memref.load %arg8[%c0_25, %c1_26] : memref<2x2xf32, #tpu.memory_space<smem>>
    %c1_27 = arith.constant 1 : index
    %c0_28 = arith.constant 0 : index
    %35 = memref.load %arg8[%c1_27, %c0_28] : memref<2x2xf32, #tpu.memory_space<smem>>
    %c1_29 = arith.constant 1 : index
    %c1_30 = arith.constant 1 : index
    %36 = memref.load %arg8[%c1_29, %c1_30] : memref<2x2xf32, #tpu.memory_space<smem>>
    %37 = vector.broadcast %33 : f32 to vector<8x256xf32>
    %38 = arith.mulf %37, %30 : vector<8x256xf32>
    %39 = vector.broadcast %34 : f32 to vector<8x256xf32>
    %40 = arith.mulf %39, %32 : vector<8x256xf32>
    %41 = arith.addf %38, %40 : vector<8x256xf32>
    %42 = vector.broadcast %23 : vector<8x1xf32> to vector<8x256xf32>
    %43 = arith.addf %41, %42 : vector<8x256xf32>
    %44 = math.tanh %43 : vector<8x256xf32>
    %45 = vector.broadcast %35 : f32 to vector<8x256xf32>
    %46 = arith.mulf %45, %30 : vector<8x256xf32>
    %47 = vector.broadcast %36 : f32 to vector<8x256xf32>
    %48 = arith.mulf %47, %32 : vector<8x256xf32>
    %49 = arith.addf %46, %48 : vector<8x256xf32>
    %50 = vector.broadcast %28 : vector<8x1xf32> to vector<8x256xf32>
    %51 = arith.addf %49, %50 : vector<8x256xf32>
    %52 = math.tanh %51 : vector<8x256xf32>
    %c0_31 = arith.constant 0 : index
    %c0_32 = arith.constant 0 : index
    %53 = vector.load %arg10[%c0_31, %c0_32] : memref<8x512xf32, #tpu.memory_space<vmem>>, vector<8x256xf32>
    tpu.vector_store %arg10[%c0_31, %c0_32], %44 {strides = array<i32>} : memref<8x512xf32, #tpu.memory_space<vmem>>, vector<8x256xf32>,
    %c0_33 = arith.constant 0 : index
    %c256 = arith.constant 256 : index
    %54 = vector.load %arg10[%c0_33, %c256] : memref<8x512xf32, #tpu.memory_space<vmem>>, vector<8x256xf32>
    tpu.vector_store %arg10[%c0_33, %c256], %52 {strides = array<i32>} : memref<8x512xf32, #tpu.memory_space<vmem>>, vector<8x256xf32>,
    %55 = arith.mulf %30, %44 : vector<8x256xf32>
    %56 = arith.mulf %32, %52 : vector<8x256xf32>
    %57 = arith.subf %55, %56 : vector<8x256xf32>
    %c0_34 = arith.constant 0 : index
    %c0_35 = arith.constant 0 : index
    %58 = vector.load %arg11[%c0_34, %c0_35] : memref<8x512xf32, #tpu.memory_space<vmem>>, vector<8x256xf32>
    tpu.vector_store %arg11[%c0_34, %c0_35], %57 {strides = array<i32>} : memref<8x512xf32, #tpu.memory_space<vmem>>, vector<8x256xf32>,
    %59 = arith.mulf %30, %52 : vector<8x256xf32>
    %60 = arith.mulf %32, %44 : vector<8x256xf32>
    %61 = arith.addf %59, %60 : vector<8x256xf32>
    %c0_36 = arith.constant 0 : index
    %c256_37 = arith.constant 256 : index
    %62 = vector.load %arg11[%c0_36, %c256_37] : memref<8x512xf32, #tpu.memory_space<vmem>>, vector<8x256xf32>
    tpu.vector_store %arg11[%c0_36, %c256_37], %61 {strides = array<i32>} : memref<8x512xf32, #tpu.memory_space<vmem>>, vector<8x256xf32>,
    %c0_38 = arith.constant 0 : index
    %c0_39 = arith.constant 0 : index
    %c0_40 = arith.constant 0 : index
    %63 = vector.load %arg7[%c0_38, %c0_39, %c0_40] : memref<8x2x256xf32, #tpu.memory_space<vmem>>, vector<8x1x256xf32>
    %64 = vector.shape_cast %63 : vector<8x1x256xf32> to vector<8x256xf32>
    %c0_41 = arith.constant 0 : index
    %c0_42 = arith.constant 0 : index
    %65 = vector.load %arg12[%c0_41, %c0_42] : memref<8x512xf32, #tpu.memory_space<vmem>>, vector<8x256xf32>
    tpu.vector_store %arg12[%c0_41, %c0_42], %64 {strides = array<i32>} : memref<8x512xf32, #tpu.memory_space<vmem>>, vector<8x256xf32>,
    %c0_43 = arith.constant 0 : index
    %c1_44 = arith.constant 1 : index
    %c0_45 = arith.constant 0 : index
    %66 = vector.load %arg7[%c0_43, %c1_44, %c0_45] : memref<8x2x256xf32, #tpu.memory_space<vmem>>, vector<8x1x256xf32>
    %67 = vector.shape_cast %66 : vector<8x1x256xf32> to vector<8x256xf32>
    %c0_46 = arith.constant 0 : index
    %c256_47 = arith.constant 256 : index
    %68 = vector.load %arg12[%c0_46, %c256_47] : memref<8x512xf32, #tpu.memory_space<vmem>>, vector<8x256xf32>
    tpu.vector_store %arg12[%c0_46, %c256_47], %67 {strides = array<i32>} : memref<8x512xf32, #tpu.memory_space<vmem>>, vector<8x256xf32>,
    return
  }
  func.func @transform_0(%arg0: i32) -> (i32, i32) {
    %c0_i32 = arith.constant 0 : i32
    %c0_i32_0 = arith.constant 0 : i32
    return %arg0, %c0_i32 : i32, i32
  }
  func.func @transform_1(%arg0: i32) -> (i32, i32) {
    %c0_i32 = arith.constant 0 : i32
    %c0_i32_0 = arith.constant 0 : i32
    %c0_i32_1 = arith.constant 0 : i32
    return %c0_i32, %c0_i32_0 : i32, i32
  }
  func.func @transform_2(%arg0: i32) -> (i32, i32) {
    %c0_i32 = arith.constant 0 : i32
    %c0_i32_0 = arith.constant 0 : i32
    %c0_i32_1 = arith.constant 0 : i32
    return %c0_i32, %c0_i32_0 : i32, i32
  }
  func.func @transform_3(%arg0: i32) -> (i32, i32) {
    %c0_i32 = arith.constant 0 : i32
    %c0_i32_0 = arith.constant 0 : i32
    %c0_i32_1 = arith.constant 0 : i32
    return %c0_i32, %c0_i32_0 : i32, i32
  }
  func.func @transform_4(%arg0: i32) -> (i32, i32) {
    %c0_i32 = arith.constant 0 : i32
    %c0_i32_0 = arith.constant 0 : i32
    %c0_i32_1 = arith.constant 0 : i32
    return %c0_i32, %c0_i32_0 : i32, i32
  }
  func.func @transform_5(%arg0: i32) -> (i32, i32, i32) {
    %c0_i32 = arith.constant 0 : i32
    %c0_i32_0 = arith.constant 0 : i32
    %c0_i32_1 = arith.constant 0 : i32
    return %arg0, %c0_i32, %c0_i32_0 : i32, i32, i32
  }
  func.func @transform_6(%arg0: i32) -> (i32, i32, i32) {
    %c0_i32 = arith.constant 0 : i32
    %c0_i32_0 = arith.constant 0 : i32
    %c0_i32_1 = arith.constant 0 : i32
    return %arg0, %c0_i32, %c0_i32_0 : i32, i32, i32
  }
  func.func @transform_7(%arg0: i32) -> (i32, i32) {
    %c0_i32 = arith.constant 0 : i32
    %c0_i32_0 = arith.constant 0 : i32
    %c0_i32_1 = arith.constant 0 : i32
    return %c0_i32, %c0_i32_0 : i32, i32
  }
  func.func @transform_8(%arg0: i32) -> (i32, i32) {
    %c0_i32 = arith.constant 0 : i32
    %c0_i32_0 = arith.constant 0 : i32
    %c0_i32_1 = arith.constant 0 : i32
    return %c0_i32, %c0_i32_0 : i32, i32
  }
  func.func @transform_9(%arg0: i32) -> (i32, i32) {
    %c0_i32 = arith.constant 0 : i32
    %c0_i32_0 = arith.constant 0 : i32
    return %arg0, %c0_i32 : i32, i32
  }
  func.func @transform_10(%arg0: i32) -> (i32, i32) {
    %c0_i32 = arith.constant 0 : i32
    %c0_i32_0 = arith.constant 0 : i32
    return %arg0, %c0_i32 : i32, i32
  }
  func.func @transform_11(%arg0: i32) -> (i32, i32) {
    %c0_i32 = arith.constant 0 : i32
    %c0_i32_0 = arith.constant 0 : i32
    return %arg0, %c0_i32 : i32, i32
  }
}

</mosaic_0001>

<llo_original>
// kernel: tpu_custom_call.1
$region0: #{tpu_custom_call.1}
  #allocation0 [shape = 'u32[]', space=smem, size = 0x4, offset = 0x4, fixed_abs, tag = 'smem constant byte address 0x4 - core index']
  #allocation1 [shape = 'u32[144,128]{1,0:T(1,128)}', space=vmem, size = 0x12000, scoped, tag = 'internal scratch']
  %s0 = inlined_call_operand.hbm [shape: f32[8,768], index: 0, kind: input, shape index: {}]
  %s1 = inlined_call_operand.hbm [shape: f32[768,128], index: 1, kind: input, shape index: {}]
  %s2 = inlined_call_operand.vmem [shape: f32[1,128], index: 2, kind: input, shape index: {}]
  %s3 = inlined_call_operand.vmem [shape: f32[2,128], index: 3, kind: input, shape index: {}]
  %s4 = inlined_call_operand.vmem [shape: f32[1,2], index: 4, kind: input, shape index: {}]
  %s5 = inlined_call_operand.hbm [shape: f32[8,2,272], index: 5, kind: input, shape index: {}]
  %s6 = inlined_call_operand.hbm [shape: f32[8,2,272], index: 6, kind: input, shape index: {}]
  %s7 = inlined_call_operand.vmem [shape: f32[2,2], index: 7, kind: input, shape index: {}]
  %s8 = inlined_call_operand.vmem [shape: f32[1,2], index: 8, kind: input, shape index: {}]
  %s9 = inlined_call_operand.hbm [shape: f32[8,512], index: 9, kind: output, shape index: {0}]
  %s10 = inlined_call_operand.hbm [shape: f32[8,512], index: 10, kind: output, shape index: {1}]
  %s11 = inlined_call_operand.hbm [shape: f32[8,512], index: 11, kind: output, shape index: {2}]
  %12 = xla_tuple %s9, %s10, %s11
  %s13 = sld [smem:[#allocation0]]
  $region90: #{tpu_custom_call.1} parent=0
    _
  %s15 = ssub.s32 1, %s13
  %s16 = scalar_select 0, %s15, %s13
  $region1: #{tpu_custom_call.1} parent=0
    #allocation2 [shape = 'u8[24576]{0}', space=vmem, size = 0x6000, scoped, tag = 'input window, operand 0, single buffered']
    #allocation3 [shape = 's32[1]{0}', space=sflag, size = 0x4, scoped, tag = 'scoped memory for tpu_custom_call.1']
    #allocation4 [shape = 's32[1]{0}', space=sflag, size = 0x4, scoped, tag = 'scoped memory for tpu_custom_call.1']
    #allocation5 [shape = 's32[1]{0}', space=sflag, size = 0x4, scoped, tag = 'scoped memory for tpu_custom_call.1']
    #allocation6 [shape = 'u8[393216]{0}', space=vmem, size = 0x60000, scoped, tag = 'input window, operand 1, single buffered']
    #allocation7 [shape = 's32[1]{0}', space=sflag, size = 0x4, scoped, tag = 'scoped memory for tpu_custom_call.1']
    #allocation8 [shape = 'u8[512]{0}', space=smem, size = 0x200, scoped, tag = 'input window, operand 4, single buffered']
    #allocation9 [shape = 'u8[16384]{0}', space=vmem, size = 0x4000, scoped, tag = 'input window, operand 5, single buffered']
    #allocation10 [shape = 'u8[16384]{0}', space=vmem, size = 0x4000, scoped, tag = 'input window, operand 6, single buffered']
    #allocation11 [shape = 's32[1]{0}', space=sflag, size = 0x4, scoped, tag = 'scoped memory for tpu_custom_call.1']
    #allocation12 [shape = 'u8[1024]{0}', space=smem, size = 0x400, scoped, tag = 'input window, operand 7, single buffered']
    #allocation13 [shape = 's32[1]{0}', space=sflag, size = 0x4, scoped, tag = 'scoped memory for tpu_custom_call.1']
    #allocation14 [shape = 'u8[512]{0}', space=smem, size = 0x200, scoped, tag = 'input window, operand 8, single buffered']
    #allocation15 [shape = 'u8[16384]{0}', space=vmem, size = 0x4000, scoped, tag = 'output window, operand 0, single buffered']
    #allocation16 [shape = 'u8[16384]{0}', space=vmem, size = 0x4000, scoped, tag = 'output window, operand 1, single buffered']
    #allocation17 [shape = 's32[1]{0}', space=sflag, size = 0x4, scoped, tag = 'scoped memory for tpu_custom_call.1']
    #allocation18 [shape = 'u8[16384]{0}', space=vmem, size = 0x4000, scoped, tag = 'output window, operand 2, single buffered']
    %17 = vsyncpa [#allocation3], 0
    %18 = vsyncpa [#allocation7], 0
    %19 = vsyncpa [#allocation5], 0
    %20 = vsyncpa [#allocation11], 0
    %21 = vsyncpa [#allocation13], 0
    %22 = vsyncpa [#allocation4], 0
    %23 = vsyncpa [#allocation17], 0
    // Predicated region
    $region2: #{tpu_custom_call.1} parent=1 // pred_check
      _
    $region3: #{tpu_custom_call.1} parent=1 // pred_check_branch
      %25 = sbr.rel (0) target = $region5
    $region4: #{tpu_custom_call.1} parent=1 // pred_region
      %s27 = ssub.s32 768, 768
      %28 = vsyncadd [#allocation3], %s27
      %s30 = sshll.u32 [#allocation2], 4
      %s31 = int_to_ptr.vmem [resolvable:$true] %s30
      %33 = dma.hbm_to_vmem [thread:$0]  %s0, 768, %s31, [#allocation3]
    $region5: #{tpu_custom_call.1} parent=1 // pred_fallthru
      _
    // Predicated region
    $region6: #{tpu_custom_call.1} parent=1 // pred_check
      _
    $region7: #{tpu_custom_call.1} parent=1 // pred_check_branch
      %35 = sbr.rel (0) target = $region9
    $region8: #{tpu_custom_call.1} parent=1 // pred_region
      %s37 = ssub.s32 12288, 12288
      %38 = vsyncadd [#allocation7], %s37
      %s39 = sshll.u32 [#allocation6], 4
      %s40 = int_to_ptr.vmem [resolvable:$true] %s39
      %45 = dma.hbm_to_vmem [thread:$0]  %s1, 12288, %s40, [#allocation7], 128, 128, 8
    $region9: #{tpu_custom_call.1} parent=1 // pred_fallthru
      _
    // Predicated region
    $region10: #{tpu_custom_call.1} parent=1 // pred_check
      _
    $region11: #{tpu_custom_call.1} parent=1 // pred_check_branch
      %47 = sbr.rel (0) target = $region13
    $region12: #{tpu_custom_call.1} parent=1 // pred_region
      _
    $region13: #{tpu_custom_call.1} parent=1 // pred_fallthru
      _
    // Predicated region
    $region14: #{tpu_custom_call.1} parent=1 // pred_check
      _
    $region15: #{tpu_custom_call.1} parent=1 // pred_check_branch
      %49 = sbr.rel (0) target = $region17
    $region16: #{tpu_custom_call.1} parent=1 // pred_region
      _
    $region17: #{tpu_custom_call.1} parent=1 // pred_fallthru
      _
    // Predicated region
    $region18: #{tpu_custom_call.1} parent=1 // pred_check
      _
    $region19: #{tpu_custom_call.1} parent=1 // pred_check_branch
      %51 = sbr.rel (0) target = $region21
    $region20: #{tpu_custom_call.1} parent=1 // pred_region
      %s53 = ssub.s32 16, 16
      %54 = vsyncadd [#allocation5], %s53
      %s56 = sshll.u32 %s4, 4
      %s57 = int_to_ptr.vmem [resolvable:$true] %s56
      %59 = dma.vmem_to_smem %s57, 16, [#allocation8], [#allocation5]
    $region21: #{tpu_custom_call.1} parent=1 // pred_fallthru
      _
    // Predicated region
    $region22: #{tpu_custom_call.1} parent=1 // pred_check
      _
    $region23: #{tpu_custom_call.1} parent=1 // pred_check_branch
      %61 = sbr.rel (0) target = $region25
    $region24: #{tpu_custom_call.1} parent=1 // pred_region
      %s63 = ssub.s32 512, 512
      %64 = vsyncadd [#allocation7], %s63
      %s65 = sshll.u32 [#allocation9], 4
      %s66 = int_to_ptr.vmem [resolvable:$true] %s65
      %71 = dma.hbm_to_vmem [thread:$0]  %s5, 512, %s66, [#allocation7], 96, 64, 4
    $region25: #{tpu_custom_call.1} parent=1 // pred_fallthru
      _
    // Predicated region
    $region26: #{tpu_custom_call.1} parent=1 // pred_check
      _
    $region27: #{tpu_custom_call.1} parent=1 // pred_check_branch
      %73 = sbr.rel (0) target = $region29
    $region28: #{tpu_custom_call.1} parent=1 // pred_region
      %s75 = ssub.s32 512, 512
      %76 = vsyncadd [#allocation11], %s75
      %s77 = sshll.u32 [#allocation10], 4
      %s78 = int_to_ptr.vmem [resolvable:$true] %s77
      %83 = dma.hbm_to_vmem [thread:$0]  %s6, 512, %s78, [#allocation11], 96, 64, 4
    $region29: #{tpu_custom_call.1} parent=1 // pred_fallthru
      _
    // Predicated region
    $region30: #{tpu_custom_call.1} parent=1 // pred_check
      _
    $region31: #{tpu_custom_call.1} parent=1 // pred_check_branch
      %85 = sbr.rel (0) target = $region33
    $region32: #{tpu_custom_call.1} parent=1 // pred_region
      %s87 = ssub.s32 32, 32
      %88 = vsyncadd [#allocation13], %s87
      %s90 = sshll.u32 %s7, 4
      %s91 = int_to_ptr.vmem [resolvable:$true] %s90
      %93 = dma.vmem_to_smem %s91, 32, [#allocation12], [#allocation13]
    $region33: #{tpu_custom_call.1} parent=1 // pred_fallthru
      _
    // Predicated region
    $region34: #{tpu_custom_call.1} parent=1 // pred_check
      _
    $region35: #{tpu_custom_call.1} parent=1 // pred_check_branch
      %95 = sbr.rel (0) target = $region37
    $region36: #{tpu_custom_call.1} parent=1 // pred_region
      %s97 = ssub.s32 16, 16
      %98 = vsyncadd [#allocation13], %s97
      %s100 = sshll.u32 %s8, 4
      %s101 = int_to_ptr.vmem [resolvable:$true] %s100
      %103 = dma.vmem_to_smem %s101, 16, [#allocation14], [#allocation13]
    $region37: #{tpu_custom_call.1} parent=1 // pred_fallthru
      _
    // Predicated region
    $region38: #{tpu_custom_call.1} parent=1 // pred_check
      _
    $region39: #{tpu_custom_call.1} parent=1 // pred_check_branch
      %105 = sbr.rel (0) target = $region41
    $region40: #{tpu_custom_call.1} parent=1 // pred_region
      %106 = dma.done [#allocation3], 768
    $region41: #{tpu_custom_call.1} parent=1 // pred_fallthru
      _
    // Predicated region
    $region42: #{tpu_custom_call.1} parent=1 // pred_check
      _
    $region43: #{tpu_custom_call.1} parent=1 // pred_check_branch
      %108 = sbr.rel (0) target = $region45
    $region44: #{tpu_custom_call.1} parent=1 // pred_region
      %109 = dma.done [#allocation7], 12288
    $region45: #{tpu_custom_call.1} parent=1 // pred_fallthru
      _
    // Predicated region
    $region46: #{tpu_custom_call.1} parent=1 // pred_check
      _
    $region47: #{tpu_custom_call.1} parent=1 // pred_check_branch
      %111 = sbr.rel (0) target = $region49
    $region48: #{tpu_custom_call.1} parent=1 // pred_region
      %112 = dma.done [#allocation5], 16
    $region49: #{tpu_custom_call.1} parent=1 // pred_fallthru
      _
    // Predicated region
    $region50: #{tpu_custom_call.1} parent=1 // pred_check
      _
    $region51: #{tpu_custom_call.1} parent=1 // pred_check_branch
      %114 = sbr.rel (0) target = $region53
    $region52: #{tpu_custom_call.1} parent=1 // pred_region
      %115 = dma.done [#allocation7], 512
    $region53: #{tpu_custom_call.1} parent=1 // pred_fallthru
      _
    // Predicated region
    $region54: #{tpu_custom_call.1} parent=1 // pred_check
      _
    $region55: #{tpu_custom_call.1} parent=1 // pred_check_branch
      %117 = sbr.rel (0) target = $region57
    $region56: #{tpu_custom_call.1} parent=1 // pred_region
      %118 = dma.done [#allocation11], 512
    $region57: #{tpu_custom_call.1} parent=1 // pred_fallthru
      _
    // Predicated region
    $region58: #{tpu_custom_call.1} parent=1 // pred_check
      _
    $region59: #{tpu_custom_call.1} parent=1 // pred_check_branch
      %120 = sbr.rel (0) target = $region61
    $region60: #{tpu_custom_call.1} parent=1 // pred_region
      %121 = dma.done [#allocation13], 32
    $region61: #{tpu_custom_call.1} parent=1 // pred_fallthru
      _
    // Predicated region
    $region62: #{tpu_custom_call.1} parent=1 // pred_check
      _
    $region63: #{tpu_custom_call.1} parent=1 // pred_check_branch
      %123 = sbr.rel (0) target = $region65
    $region64: #{tpu_custom_call.1} parent=1 // pred_region
      %124 = dma.done [#allocation13], 16
    $region65: #{tpu_custom_call.1} parent=1 // pred_fallthru
      _
    %125 = sfence
    %v126 = vld [vmem:[#allocation2] sm:$0xff]
    %v127 = vld [vmem:[#allocation2 + $0x8] sm:$0xff]
    %v128 = vld [vmem:[#allocation2 + $0x10] sm:$0xff]
    %v129 = vld [vmem:[#allocation2 + $0x18] sm:$0xff]
    %v130 = vld [vmem:[#allocation2 + $0x20] sm:$0xff]
    %v131 = vld [vmem:[#allocation2 + $0x28] sm:$0xff]
    %v132 = vld [vmem:[#allocation6] sm:$0xff]
    %v133 = vld [vmem:[#allocation6 + $0x8] sm:$0xff]
    %v134 = vld [vmem:[#allocation6 + $0x10] sm:$0xff]
    %v135 = vld [vmem:[#allocation6 + $0x18] sm:$0xff]
    %v136 = vld [vmem:[#allocation6 + $0x20] sm:$0xff]
    %v137 = vld [vmem:[#allocation6 + $0x28] sm:$0xff]
    %v138 = vld [vmem:[#allocation6 + $0x30] sm:$0xff]
    %v139 = vld [vmem:[#allocation6 + $0x38] sm:$0xff]
    %v140 = vld [vmem:[#allocation6 + $0x40] sm:$0xff]
    %v141 = vld [vmem:[#allocation6 + $0x48] sm:$0xff]
    %v142 = vld [vmem:[#allocation6 + $0x50] sm:$0xff]
    %v143 = vld [vmem:[#allocation6 + $0x58] sm:$0xff]
    %v144 = vld [vmem:[#allocation6 + $0x60] sm:$0xff]
    %v145 = vld [vmem:[#allocation6 + $0x68] sm:$0xff]
    %v146 = vld [vmem:[#allocation6 + $0x70] sm:$0xff]
    %v147 = vld [vmem:[#allocation6 + $0x78] sm:$0xff]
    %v148 = vld [vmem:[#allocation6 + $0x80] sm:$0xff]
    %v149 = vld [vmem:[#allocation6 + $0x88] sm:$0xff]
    %v150 = vld [vmem:[#allocation6 + $0x90] sm:$0xff]
    %v151 = vld [vmem:[#allocation6 + $0x98] sm:$0xff]
    %v152 = vld [vmem:[#allocation6 + $0xa0] sm:$0xff]
    %v153 = vld [vmem:[#allocation6 + $0xa8] sm:$0xff]
    %v154 = vld [vmem:[#allocation6 + $0xb0] sm:$0xff]
    %v155 = vld [vmem:[#allocation6 + $0xb8] sm:$0xff]
    %v156 = vld [vmem:[#allocation6 + $0xc0] sm:$0xff]
    %v157 = vld [vmem:[#allocation6 + $0xc8] sm:$0xff]
    %v158 = vld [vmem:[#allocation6 + $0xd0] sm:$0xff]
    %v159 = vld [vmem:[#allocation6 + $0xd8] sm:$0xff]
    %v160 = vld [vmem:[#allocation6 + $0xe0] sm:$0xff]
    %v161 = vld [vmem:[#allocation6 + $0xe8] sm:$0xff]
    %v162 = vld [vmem:[#allocation6 + $0xf0] sm:$0xff]
    %v163 = vld [vmem:[#allocation6 + $0xf8] sm:$0xff]
    %v164 = vld [vmem:[#allocation6 + $0x100] sm:$0xff]
    %v165 = vld [vmem:[#allocation6 + $0x108] sm:$0xff]
    %v166 = vld [vmem:[#allocation6 + $0x110] sm:$0xff]
    %v167 = vld [vmem:[#allocation6 + $0x118] sm:$0xff]
    %v168 = vld [vmem:[#allocation6 + $0x120] sm:$0xff]
    %v169 = vld [vmem:[#allocation6 + $0x128] sm:$0xff]
    %v170 = vld [vmem:[#allocation6 + $0x130] sm:$0xff]
    %v171 = vld [vmem:[#allocation6 + $0x138] sm:$0xff]
    %v172 = vld [vmem:[#allocation6 + $0x140] sm:$0xff]
    %v173 = vld [vmem:[#allocation6 + $0x148] sm:$0xff]
    %v174 = vld [vmem:[#allocation6 + $0x150] sm:$0xff]
    %v175 = vld [vmem:[#allocation6 + $0x158] sm:$0xff]
    %v176 = vld [vmem:[#allocation6 + $0x160] sm:$0xff]
    %v177 = vld [vmem:[#allocation6 + $0x168] sm:$0xff]
    %v178 = vld [vmem:[#allocation6 + $0x170] sm:$0xff]
    %v179 = vld [vmem:[#allocation6 + $0x178] sm:$0xff]
    %v180 = vld [vmem:[#allocation6 + $0x180] sm:$0xff]
    %v181 = vld [vmem:[#allocation6 + $0x188] sm:$0xff]
    %v182 = vld [vmem:[#allocation6 + $0x190] sm:$0xff]
    %v183 = vld [vmem:[#allocation6 + $0x198] sm:$0xff]
    %v184 = vld [vmem:[#allocation6 + $0x1a0] sm:$0xff]
    %v185 = vld [vmem:[#allocation6 + $0x1a8] sm:$0xff]
    %v186 = vld [vmem:[#allocation6 + $0x1b0] sm:$0xff]
    %v187 = vld [vmem:[#allocation6 + $0x1b8] sm:$0xff]
    %v188 = vld [vmem:[#allocation6 + $0x1c0] sm:$0xff]
    %v189 = vld [vmem:[#allocation6 + $0x1c8] sm:$0xff]
    %v190 = vld [vmem:[#allocation6 + $0x1d0] sm:$0xff]
    %v191 = vld [vmem:[#allocation6 + $0x1d8] sm:$0xff]
    %v192 = vld [vmem:[#allocation6 + $0x1e0] sm:$0xff]
    %v193 = vld [vmem:[#allocation6 + $0x1e8] sm:$0xff]
    %v194 = vld [vmem:[#allocation6 + $0x1f0] sm:$0xff]
    %v195 = vld [vmem:[#allocation6 + $0x1f8] sm:$0xff]
    %v196 = vld [vmem:[#allocation6 + $0x200] sm:$0xff]
    %v197 = vld [vmem:[#allocation6 + $0x208] sm:$0xff]
    %v198 = vld [vmem:[#allocation6 + $0x210] sm:$0xff]
    %v199 = vld [vmem:[#allocation6 + $0x218] sm:$0xff]
    %v200 = vld [vmem:[#allocation6 + $0x220] sm:$0xff]
    %v201 = vld [vmem:[#allocation6 + $0x228] sm:$0xff]
    %v202 = vld [vmem:[#allocation6 + $0x230] sm:$0xff]
    %v203 = vld [vmem:[#allocation6 + $0x238] sm:$0xff]
    %v204 = vld [vmem:[#allocation6 + $0x240] sm:$0xff]
    %v205 = vld [vmem:[#allocation6 + $0x248] sm:$0xff]
    %v206 = vld [vmem:[#allocation6 + $0x250] sm:$0xff]
    %v207 = vld [vmem:[#allocation6 + $0x258] sm:$0xff]
    %v208 = vld [vmem:[#allocation6 + $0x260] sm:$0xff]
    %v209 = vld [vmem:[#allocation6 + $0x268] sm:$0xff]
    %v210 = vld [vmem:[#allocation6 + $0x270] sm:$0xff]
    %v211 = vld [vmem:[#allocation6 + $0x278] sm:$0xff]
    %v212 = vld [vmem:[#allocation6 + $0x280] sm:$0xff]
    %v213 = vld [vmem:[#allocation6 + $0x288] sm:$0xff]
    %v214 = vld [vmem:[#allocation6 + $0x290] sm:$0xff]
    %v215 = vld [vmem:[#allocation6 + $0x298] sm:$0xff]
    %v216 = vld [vmem:[#allocation6 + $0x2a0] sm:$0xff]
    %v217 = vld [vmem:[#allocation6 + $0x2a8] sm:$0xff]
    %v218 = vld [vmem:[#allocation6 + $0x2b0] sm:$0xff]
    %v219 = vld [vmem:[#allocation6 + $0x2b8] sm:$0xff]
    %v220 = vld [vmem:[#allocation6 + $0x2c0] sm:$0xff]
    %v221 = vld [vmem:[#allocation6 + $0x2c8] sm:$0xff]
    %v222 = vld [vmem:[#allocation6 + $0x2d0] sm:$0xff]
    %v223 = vld [vmem:[#allocation6 + $0x2d8] sm:$0xff]
    %v224 = vld [vmem:[#allocation6 + $0x2e0] sm:$0xff]
    %v225 = vld [vmem:[#allocation6 + $0x2e8] sm:$0xff]
    %v226 = vld [vmem:[#allocation6 + $0x2f0] sm:$0xff]
    %v227 = vld [vmem:[#allocation6 + $0x2f8] sm:$0xff]
    %v228 = vld [vmem:[%s2] sm:$0x1]
    %v230 = vlaneseq
    %v231 = vshrl.u32 %v230, 7
    %v232 = vsub.s32 0, %v231
    %v233 = vrot.slane %v228, %v232
    %235 = vmatprep.subr.mxu0 0.0
    %236 = vmatpush1.msra.mxu0 %v132
    %237 = vmatprep.subr.mxu0 0.0
    %238 = vmatpush1.msra.mxu0 %v133
    %239 = vmatprep.subr.mxu0 0.0
    %240 = vmatpush1.msra.mxu0 %v134
    %241 = vmatprep.subr.mxu0 0.0
    %242 = vmatpush1.msra.mxu0 %v135
    %243 = vmatprep.subr.mxu0 0.0
    %244 = vmatpush1.msra.mxu0 %v136
    %245 = vmatprep.subr.mxu0 0.0
    %246 = vmatpush1.msra.mxu0 %v137
    %247 = vmatprep.subr.mxu0 0.0
    %248 = vmatpush1.msra.mxu0 %v138
    %249 = vmatprep.subr.mxu0 0.0
    %250 = vmatpush1.msra.mxu0 %v139
    %251 = vmatprep.subr.mxu0 0.0
    %252 = vmatpush1.msra.mxu0 %v140
    %253 = vmatprep.subr.mxu0 0.0
    %254 = vmatpush1.msra.mxu0 %v141
    %255 = vmatprep.subr.mxu0 0.0
    %256 = vmatpush1.msra.mxu0 %v142
    %257 = vmatprep.subr.mxu0 0.0
    %258 = vmatpush1.msra.mxu0 %v143
    %259 = vmatprep.subr.mxu0 0.0
    %260 = vmatpush1.msra.mxu0 %v144
    %261 = vmatprep.subr.mxu0 0.0
    %262 = vmatpush1.msra.mxu0 %v145
    %263 = vmatprep.subr.mxu0 0.0
    %264 = vmatpush1.msra.mxu0 %v146
    %265 = vmatprep.subr.mxu0 0.0
    %266 = vmatpush1.msra.mxu0 %v147
    %267 = vmatprep.subr.mxu0 0.0
    %268 = vmatpush1.msra.mxu0 %v148
    %269 = vmatprep.subr.mxu0 0.0
    %270 = vmatpush1.msra.mxu0 %v149
    %271 = vmatprep.subr.mxu0 0.0
    %272 = vmatpush1.msra.mxu0 %v150
    %273 = vmatprep.subr.mxu0 0.0
    %274 = vmatpush1.msra.mxu0 %v151
    %275 = vmatprep.subr.mxu0 0.0
    %276 = vmatpush1.msra.mxu0 %v152
    %277 = vmatprep.subr.mxu0 0.0
    %278 = vmatpush1.msra.mxu0 %v153
    %279 = vmatprep.subr.mxu0 0.0
    %280 = vmatpush1.msra.mxu0 %v154
    %281 = vmatprep.subr.mxu0 0.0
    %282 = vmatpush1.msra.mxu0 %v155
    %283 = vmatprep.subr.mxu0 0.0
    %284 = vmatpush1.msra.mxu0 %v156
    %285 = vmatprep.subr.mxu0 0.0
    %286 = vmatpush1.msra.mxu0 %v157
    %287 = vmatprep.subr.mxu0 0.0
    %288 = vmatpush1.msra.mxu0 %v158
    %289 = vmatprep.subr.mxu0 0.0
    %290 = vmatpush1.msra.mxu0 %v159
    %291 = vmatprep.subr.mxu0 0.0
    %292 = vmatpush1.msra.mxu0 %v160
    %293 = vmatprep.subr.mxu0 0.0
    %294 = vmatpush1.msra.mxu0 %v161
    %295 = vmatprep.subr.mxu0 0.0
    %296 = vmatpush1.msra.mxu0 %v162
    %297 = vmatprep.subr.mxu0 0.0
    %298 = vmatpush1.msra.mxu0 %v163
    %299 = vmatprep.mubr.f32.mxu0 %v127
    %300 = vmatmul.mubr.f32.gmra.mrb[0].mxu0 %v126
    %v301 = vpop.f32.mrb[0].mxu0
    %v302 = vadd.f32 %v233, %v301
    %v303 = vpop.f32.mrb[0].mxu0
    %304 = vdwg.mxu0
    %305 = vmatprep.subr.mxu0 0.0
    %306 = vmatpush1.msra.mxu0 %v164
    %307 = vmatprep.subr.mxu0 0.0
    %308 = vmatpush1.msra.mxu0 %v165
    %309 = vmatprep.subr.mxu0 0.0
    %310 = vmatpush1.msra.mxu0 %v166
    %311 = vmatprep.subr.mxu0 0.0
    %312 = vmatpush1.msra.mxu0 %v167
    %313 = vmatprep.subr.mxu0 0.0
    %314 = vmatpush1.msra.mxu0 %v168
    %315 = vmatprep.subr.mxu0 0.0
    %316 = vmatpush1.msra.mxu0 %v169
    %317 = vmatprep.subr.mxu0 0.0
    %318 = vmatpush1.msra.mxu0 %v170
    %319 = vmatprep.subr.mxu0 0.0
    %320 = vmatpush1.msra.mxu0 %v171
    %321 = vmatprep.subr.mxu0 0.0
    %322 = vmatpush1.msra.mxu0 %v172
    %323 = vmatprep.subr.mxu0 0.0
    %324 = vmatpush1.msra.mxu0 %v173
    %325 = vmatprep.subr.mxu0 0.0
    %326 = vmatpush1.msra.mxu0 %v174
    %327 = vmatprep.subr.mxu0 0.0
    %328 = vmatpush1.msra.mxu0 %v175
    %329 = vmatprep.subr.mxu0 0.0
    %330 = vmatpush1.msra.mxu0 %v176
    %331 = vmatprep.subr.mxu0 0.0
    %332 = vmatpush1.msra.mxu0 %v177
    %333 = vmatprep.subr.mxu0 0.0
    %334 = vmatpush1.msra.mxu0 %v178
    %335 = vmatprep.subr.mxu0 0.0
    %336 = vmatpush1.msra.mxu0 %v179
    %337 = vmatprep.subr.mxu0 0.0
    %338 = vmatpush1.msra.mxu0 %v180
    %339 = vmatprep.subr.mxu0 0.0
    %340 = vmatpush1.msra.mxu0 %v181
    %341 = vmatprep.subr.mxu0 0.0
    %342 = vmatpush1.msra.mxu0 %v182
    %343 = vmatprep.subr.mxu0 0.0
    %344 = vmatpush1.msra.mxu0 %v183
    %345 = vmatprep.subr.mxu0 0.0
    %346 = vmatpush1.msra.mxu0 %v184
    %347 = vmatprep.subr.mxu0 0.0
    %348 = vmatpush1.msra.mxu0 %v185
    %349 = vmatprep.subr.mxu0 0.0
    %350 = vmatpush1.msra.mxu0 %v186
    %351 = vmatprep.subr.mxu0 0.0
    %352 = vmatpush1.msra.mxu0 %v187
    %353 = vmatprep.subr.mxu0 0.0
    %354 = vmatpush1.msra.mxu0 %v188
    %355 = vmatprep.subr.mxu0 0.0
    %356 = vmatpush1.msra.mxu0 %v189
    %357 = vmatprep.subr.mxu0 0.0
    %358 = vmatpush1.msra.mxu0 %v190
    %359 = vmatprep.subr.mxu0 0.0
    %360 = vmatpush1.msra.mxu0 %v191
    %361 = vmatprep.subr.mxu0 0.0
    %362 = vmatpush1.msra.mxu0 %v192
    %363 = vmatprep.subr.mxu0 0.0
    %364 = vmatpush1.msra.mxu0 %v193
    %365 = vmatprep.subr.mxu0 0.0
    %366 = vmatpush1.msra.mxu0 %v194
    %367 = vmatprep.subr.mxu0 0.0
    %368 = vmatpush1.msra.mxu0 %v195
    %369 = vmatprep.mubr.f32.mxu0 %v129
    %370 = vmatmul.mubr.f32.gmra.mrb[0].mxu0 %v128
    %v371 = vpop.f32.mrb[0].mxu0
    %v372 = vadd.f32 %v302, %v371
    %v373 = vpop.f32.mrb[0].mxu0
    %374 = vdwg.mxu0
    %375 = vmatprep.subr.mxu0 0.0
    %376 = vmatpush1.msra.mxu0 %v196
    %377 = vmatprep.subr.mxu0 0.0
    %378 = vmatpush1.msra.mxu0 %v197
    %379 = vmatprep.subr.mxu0 0.0
    %380 = vmatpush1.msra.mxu0 %v198
    %381 = vmatprep.subr.mxu0 0.0
    %382 = vmatpush1.msra.mxu0 %v199
    %383 = vmatprep.subr.mxu0 0.0
    %384 = vmatpush1.msra.mxu0 %v200
    %385 = vmatprep.subr.mxu0 0.0
    %386 = vmatpush1.msra.mxu0 %v201
    %387 = vmatprep.subr.mxu0 0.0
    %388 = vmatpush1.msra.mxu0 %v202
    %389 = vmatprep.subr.mxu0 0.0
    %390 = vmatpush1.msra.mxu0 %v203
    %391 = vmatprep.subr.mxu0 0.0
    %392 = vmatpush1.msra.mxu0 %v204
    %393 = vmatprep.subr.mxu0 0.0
    %394 = vmatpush1.msra.mxu0 %v205
    %395 = vmatprep.subr.mxu0 0.0
    %396 = vmatpush1.msra.mxu0 %v206
    %397 = vmatprep.subr.mxu0 0.0
    %398 = vmatpush1.msra.mxu0 %v207
    %399 = vmatprep.subr.mxu0 0.0
    %400 = vmatpush1.msra.mxu0 %v208
    %401 = vmatprep.subr.mxu0 0.0
    %402 = vmatpush1.msra.mxu0 %v209
    %403 = vmatprep.subr.mxu0 0.0
    %404 = vmatpush1.msra.mxu0 %v210
    %405 = vmatprep.subr.mxu0 0.0
    %406 = vmatpush1.msra.mxu0 %v211
    %407 = vmatprep.subr.mxu0 0.0
    %408 = vmatpush1.msra.mxu0 %v212
    %409 = vmatprep.subr.mxu0 0.0
    %410 = vmatpush1.msra.mxu0 %v213
    %411 = vmatprep.subr.mxu0 0.0
    %412 = vmatpush1.msra.mxu0 %v214
    %413 = vmatprep.subr.mxu0 0.0
    %414 = vmatpush1.msra.mxu0 %v215
    %415 = vmatprep.subr.mxu0 0.0
    %416 = vmatpush1.msra.mxu0 %v216
    %417 = vmatprep.subr.mxu0 0.0
    %418 = vmatpush1.msra.mxu0 %v217
    %419 = vmatprep.subr.mxu0 0.0
    %420 = vmatpush1.msra.mxu0 %v218
    %421 = vmatprep.subr.mxu0 0.0
    %422 = vmatpush1.msra.mxu0 %v219
    %423 = vmatprep.subr.mxu0 0.0
    %424 = vmatpush1.msra.mxu0 %v220
    %425 = vmatprep.subr.mxu0 0.0
    %426 = vmatpush1.msra.mxu0 %v221
    %427 = vmatprep.subr.mxu0 0.0
    %428 = vmatpush1.msra.mxu0 %v222
    %429 = vmatprep.subr.mxu0 0.0
    %430 = vmatpush1.msra.mxu0 %v223
    %431 = vmatprep.subr.mxu0 0.0
    %432 = vmatpush1.msra.mxu0 %v224
    %433 = vmatprep.subr.mxu0 0.0
    %434 = vmatpush1.msra.mxu0 %v225
    %435 = vmatprep.subr.mxu0 0.0
    %436 = vmatpush1.msra.mxu0 %v226
    %437 = vmatprep.subr.mxu0 0.0
    %438 = vmatpush1.msra.mxu0 %v227
    %439 = vmatprep.mubr.f32.mxu0 %v131
    %440 = vmatmul.mubr.f32.gmra.mrb[0].mxu0 %v130
    %v441 = vpop.f32.mrb[0].mxu0
    %v442 = vadd.f32 %v372, %v441
    %v443 = vpop.f32.mrb[0].mxu0
    %444 = vdwg.mxu0
    %v445 = vmax.f32 %v442, 0.0
    %v446 = vld [vmem:[%s3] sm:$0x3]
    %v447 = vlaneseq
    %v448 = vshrl.u32 %v447, 7
    %v449 = vsub.s32 0, %v448
    %v450 = vrot.slane %v446, %v449
    %v451 = vmul.f32 %v445, %v450
    %452 = vadd.xlane.f32.xlu0 %v451
    %v453 = vpop.xlane.xlu0 %452
    %v454 = vlaneseq
    %v455 = vshrl.u32 %v454, 7
    %v456 = vsub.s32 1, %v455
    %v457 = vrot.slane %v446, %v456
    %v458 = vmul.f32 %v445, %v457
    %459 = vadd.xlane.f32.xlu0 %v458
    %v460 = vpop.xlane.xlu0 %459
    %s461 = sld [smem:[#allocation8]]
    %s462 = sld [smem:[#allocation14]]
    %s463 = sadd.f32 %s461, %s462
    %v464 = vstv %s463
    %v465 = vadd.f32 %v453, %v464
    %s466 = sld [smem:[#allocation8 + $0x1]]
    %s467 = sld [smem:[#allocation14 + $0x1]]
    %s468 = sadd.f32 %s466, %s467
    %v469 = vstv %s468
    %v470 = vadd.f32 %v460, %v469
    %v471 = vld [vmem:[#allocation9] ss:$2 sm:$0x3]
    %s472 = scalar_lea.vmem [#allocation9], 4
    %v473 = vld [vmem:[%s472] ss:$2 sm:$0x3]
    %s474 = scalar_lea.vmem [#allocation9], 8
    %v475 = vld [vmem:[%s474] ss:$2 sm:$0x3]
    %s476 = scalar_lea.vmem [#allocation9], 12
    %v477 = vld [vmem:[%s476] ss:$2 sm:$0x3]
    %s478 = scalar_lea.vmem [#allocation9], 16
    %v479 = vld [vmem:[%s478] ss:$2 sm:$0x3]
    %s480 = scalar_lea.vmem [#allocation9], 20
    %v481 = vld [vmem:[%s480] ss:$2 sm:$0x3]
    %s482 = scalar_lea.vmem [#allocation9], 24
    %v483 = vld [vmem:[%s482] ss:$2 sm:$0x3]
    %s484 = scalar_lea.vmem [#allocation9], 28
    %v485 = vld [vmem:[%s484] ss:$2 sm:$0x3]
    %s486 = scalar_lea.vmem [#allocation9], 1
    %v487 = vld [vmem:[%s486] ss:$2 sm:$0x3]
    %s488 = scalar_lea.vmem [#allocation9], 5
    %v489 = vld [vmem:[%s488] ss:$2 sm:$0x3]
    %s490 = scalar_lea.vmem [#allocation9], 9
    %v491 = vld [vmem:[%s490] ss:$2 sm:$0x3]
    %s492 = scalar_lea.vmem [#allocation9], 13
    %v493 = vld [vmem:[%s492] ss:$2 sm:$0x3]
    %s494 = scalar_lea.vmem [#allocation9], 17
    %v495 = vld [vmem:[%s494] ss:$2 sm:$0x3]
    %s496 = scalar_lea.vmem [#allocation9], 21
    %v497 = vld [vmem:[%s496] ss:$2 sm:$0x3]
    %s498 = scalar_lea.vmem [#allocation9], 25
    %v499 = vld [vmem:[%s498] ss:$2 sm:$0x3]
    %s500 = scalar_lea.vmem [#allocation9], 29
    %v501 = vld [vmem:[%s500] ss:$2 sm:$0x3]
    %s502 = sld [smem:[#allocation12]]
    %s503 = sld [smem:[#allocation12 + $0x1]]
    %s504 = sld [smem:[#allocation12 + $0x80]]
    %s505 = sld [smem:[#allocation12 + $0x81]]
    %v506 = vstv %s502
    %v507 = vmul.f32 %v506, %v471
    %v508 = vmul.f32 %v506, %v473
    %v509 = vmul.f32 %v506, %v475
    %v510 = vmul.f32 %v506, %v477
    %v511 = vmul.f32 %v506, %v479
    %v512 = vmul.f32 %v506, %v481
    %v513 = vmul.f32 %v506, %v483
    %v514 = vmul.f32 %v506, %v485
    %v515 = vstv %s503
    %v516 = vmul.f32 %v515, %v487
    %v517 = vmul.f32 %v515, %v489
    %v518 = vmul.f32 %v515, %v491
    %v519 = vmul.f32 %v515, %v493
    %v520 = vmul.f32 %v515, %v495
    %v521 = vmul.f32 %v515, %v497
    %v522 = vmul.f32 %v515, %v499
    %v523 = vmul.f32 %v515, %v501
    %v524 = vadd.f32 %v507, %v516
    %v525 = vadd.f32 %v508, %v517
    %v526 = vadd.f32 %v509, %v518
    %v527 = vadd.f32 %v510, %v519
    %v528 = vadd.f32 %v511, %v520
    %v529 = vadd.f32 %v512, %v521
    %v530 = vadd.f32 %v513, %v522
    %v531 = vadd.f32 %v514, %v523
    %v533 = vlaneseq
    %v534 = vshrl.u32 %v533, 7
    %v535 = vsub.s32 0, %v534
    %v536 = vrot.slane %v465, %v535
    %v537 = vlaneseq
    %v538 = vshrl.u32 %v537, 7
    %v539 = vsub.s32 1, %v538
    %v540 = vrot.slane %v465, %v539
    %v541 = vlaneseq
    %v542 = vshrl.u32 %v541, 7
    %v543 = vsub.s32 2, %v542
    %v544 = vrot.slane %v465, %v543
    %v545 = vlaneseq
    %v546 = vshrl.u32 %v545, 7
    %v547 = vsub.s32 3, %v546
    %v548 = vrot.slane %v465, %v547
    %v549 = vlaneseq
    %v550 = vshrl.u32 %v549, 7
    %v551 = vsub.s32 4, %v550
    %v552 = vrot.slane %v465, %v551
    %v553 = vlaneseq
    %v554 = vshrl.u32 %v553, 7
    %v555 = vsub.s32 5, %v554
    %v556 = vrot.slane %v465, %v555
    %v557 = vlaneseq
    %v558 = vshrl.u32 %v557, 7
    %v559 = vsub.s32 6, %v558
    %v560 = vrot.slane %v465, %v559
    %v561 = vlaneseq
    %v562 = vshrl.u32 %v561, 7
    %v563 = vsub.s32 7, %v562
    %v564 = vrot.slane %v465, %v563
    %v573 = vadd.f32 %v524, %v536
    %v574 = vadd.f32 %v525, %v540
    %v575 = vadd.f32 %v526, %v544
    %v576 = vadd.f32 %v527, %v548
    %v577 = vadd.f32 %v528, %v552
    %v578 = vadd.f32 %v529, %v556
    %v579 = vadd.f32 %v530, %v560
    %v580 = vadd.f32 %v531, %v564
    %v581 = vtanh.pop %v573
    %v582 = vtanh.pop %v574
    %v583 = vtanh.pop %v575
    %v584 = vtanh.pop %v576
    %v585 = vtanh.pop %v577
    %v586 = vtanh.pop %v578
    %v587 = vtanh.pop %v579
    %v588 = vtanh.pop %v580
    %v589 = vstv %s504
    %v590 = vmul.f32 %v589, %v471
    %v591 = vmul.f32 %v589, %v473
    %v592 = vmul.f32 %v589, %v475
    %v593 = vmul.f32 %v589, %v477
    %v594 = vmul.f32 %v589, %v479
    %v595 = vmul.f32 %v589, %v481
    %v596 = vmul.f32 %v589, %v483
    %v597 = vmul.f32 %v589, %v485
    %v598 = vstv %s505
    %v599 = vmul.f32 %v598, %v487
    %v600 = vmul.f32 %v598, %v489
    %v601 = vmul.f32 %v598, %v491
    %v602 = vmul.f32 %v598, %v493
    %v603 = vmul.f32 %v598, %v495
    %v604 = vmul.f32 %v598, %v497
    %v605 = vmul.f32 %v598, %v499
    %v606 = vmul.f32 %v598, %v501
    %v607 = vadd.f32 %v590, %v599
    %v608 = vadd.f32 %v591, %v600
    %v609 = vadd.f32 %v592, %v601
    %v610 = vadd.f32 %v593, %v602
    %v611 = vadd.f32 %v594, %v603
    %v612 = vadd.f32 %v595, %v604
    %v613 = vadd.f32 %v596, %v605
    %v614 = vadd.f32 %v597, %v606
    %v616 = vlaneseq
    %v617 = vshrl.u32 %v616, 7
    %v618 = vsub.s32 0, %v617
    %v619 = vrot.slane %v470, %v618
    %v620 = vlaneseq
    %v621 = vshrl.u32 %v620, 7
    %v622 = vsub.s32 1, %v621
    %v623 = vrot.slane %v470, %v622
    %v624 = vlaneseq
    %v625 = vshrl.u32 %v624, 7
    %v626 = vsub.s32 2, %v625
    %v627 = vrot.slane %v470, %v626
    %v628 = vlaneseq
    %v629 = vshrl.u32 %v628, 7
    %v630 = vsub.s32 3, %v629
    %v631 = vrot.slane %v470, %v630
    %v632 = vlaneseq
    %v633 = vshrl.u32 %v632, 7
    %v634 = vsub.s32 4, %v633
    %v635 = vrot.slane %v470, %v634
    %v636 = vlaneseq
    %v637 = vshrl.u32 %v636, 7
    %v638 = vsub.s32 5, %v637
    %v639 = vrot.slane %v470, %v638
    %v640 = vlaneseq
    %v641 = vshrl.u32 %v640, 7
    %v642 = vsub.s32 6, %v641
    %v643 = vrot.slane %v470, %v642
    %v644 = vlaneseq
    %v645 = vshrl.u32 %v644, 7
    %v646 = vsub.s32 7, %v645
    %v647 = vrot.slane %v470, %v646
    %v656 = vadd.f32 %v607, %v619
    %v657 = vadd.f32 %v608, %v623
    %v658 = vadd.f32 %v609, %v627
    %v659 = vadd.f32 %v610, %v631
    %v660 = vadd.f32 %v611, %v635
    %v661 = vadd.f32 %v612, %v639
    %v662 = vadd.f32 %v613, %v643
    %v663 = vadd.f32 %v614, %v647
    %v664 = vtanh.pop %v656
    %v665 = vtanh.pop %v657
    %v666 = vtanh.pop %v658
    %v667 = vtanh.pop %v659
    %v668 = vtanh.pop %v660
    %v669 = vtanh.pop %v661
    %v670 = vtanh.pop %v662
    %v671 = vtanh.pop %v663
    %v680 = vcombine.low %v581, %v582
    %v681 = vcombine.low %v583, %v584
    %v682 = vcombine.low %v585, %v586
    %v683 = vcombine.low %v587, %v588
    %v685 = vunpack.c.l.s4 1966171168
    %v686 = vunpack.c.0.s8 %v685
    %v687 = vlaneseq
    %v688 = vshrl.u32 %v687, 7
    %v689 = vsub.s32 %v686, %v688
    %v690 = vrot.slane %v680, %v689
    %v692 = vunpack.c.l.s4 1966171168
    %v693 = vunpack.c.0.s8 %v692
    %v694 = vlaneseq
    %v695 = vshrl.u32 %v694, 7
    %v696 = vsub.s32 %v693, %v695
    %v697 = vrot.slane %v681, %v696
    %v699 = vunpack.c.l.s4 1966171168
    %v700 = vunpack.c.0.s8 %v699
    %v701 = vlaneseq
    %v702 = vshrl.u32 %v701, 7
    %v703 = vsub.s32 %v700, %v702
    %v704 = vrot.slane %v682, %v703
    %v706 = vunpack.c.l.s4 1966171168
    %v707 = vunpack.c.0.s8 %v706
    %v708 = vlaneseq
    %v709 = vshrl.u32 %v708, 7
    %v710 = vsub.s32 %v707, %v709
    %v711 = vrot.slane %v683, %v710
    %v712 = vcombine.low %v690, %v697
    %v713 = vcombine.high %v690, %v697
    %v714 = vcombine.low %v704, %v711
    %v715 = vcombine.high %v704, %v711
    %v717 = vunpack.c.l.s4 1966171168
    %v718 = vunpack.c.0.s8 %v717
    %v719 = vlaneseq
    %v720 = vshrl.u32 %v719, 7
    %v721 = vsub.s32 %v718, %v720
    %v722 = vrot.slane %v712, %v721
    %v724 = vunpack.c.l.s4 1966171168
    %v725 = vunpack.c.0.s8 %v724
    %v726 = vlaneseq
    %v727 = vshrl.u32 %v726, 7
    %v728 = vsub.s32 %v725, %v727
    %v729 = vrot.slane %v713, %v728
    %v731 = vunpack.c.l.s4 1966171168
    %v732 = vunpack.c.0.s8 %v731
    %v733 = vlaneseq
    %v734 = vshrl.u32 %v733, 7
    %v735 = vsub.s32 %v732, %v734
    %v736 = vrot.slane %v714, %v735
    %v738 = vunpack.c.l.s4 1966171168
    %v739 = vunpack.c.0.s8 %v738
    %v740 = vlaneseq
    %v741 = vshrl.u32 %v740, 7
    %v742 = vsub.s32 %v739, %v741
    %v743 = vrot.slane %v715, %v742
    %v744 = vcombine.low %v722, %v736
    %v745 = vcombine.low %v729, %v743
    %748 = vst [vmem:[#allocation15] sm:$0xff] %v744
    %749 = vst [vmem:[#allocation15 + $0x8] sm:$0xff] %v745
    %v758 = vcombine.low %v664, %v665
    %v759 = vcombine.low %v666, %v667
    %v760 = vcombine.low %v668, %v669
    %v761 = vcombine.low %v670, %v671
    %v763 = vunpack.c.l.s4 1966171168
    %v764 = vunpack.c.0.s8 %v763
    %v765 = vlaneseq
    %v766 = vshrl.u32 %v765, 7
    %v767 = vsub.s32 %v764, %v766
    %v768 = vrot.slane %v758, %v767
    %v770 = vunpack.c.l.s4 1966171168
    %v771 = vunpack.c.0.s8 %v770
    %v772 = vlaneseq
    %v773 = vshrl.u32 %v772, 7
    %v774 = vsub.s32 %v771, %v773
    %v775 = vrot.slane %v759, %v774
    %v777 = vunpack.c.l.s4 1966171168
    %v778 = vunpack.c.0.s8 %v777
    %v779 = vlaneseq
    %v780 = vshrl.u32 %v779, 7
    %v781 = vsub.s32 %v778, %v780
    %v782 = vrot.slane %v760, %v781
    %v784 = vunpack.c.l.s4 1966171168
    %v785 = vunpack.c.0.s8 %v784
    %v786 = vlaneseq
    %v787 = vshrl.u32 %v786, 7
    %v788 = vsub.s32 %v785, %v787
    %v789 = vrot.slane %v761, %v788
    %v790 = vcombine.low %v768, %v775
    %v791 = vcombine.high %v768, %v775
    %v792 = vcombine.low %v782, %v789
    %v793 = vcombine.high %v782, %v789
    %v795 = vunpack.c.l.s4 1966171168
    %v796 = vunpack.c.0.s8 %v795
    %v797 = vlaneseq
    %v798 = vshrl.u32 %v797, 7
    %v799 = vsub.s32 %v796, %v798
    %v800 = vrot.slane %v790, %v799
    %v802 = vunpack.c.l.s4 1966171168
    %v803 = vunpack.c.0.s8 %v802
    %v804 = vlaneseq
    %v805 = vshrl.u32 %v804, 7
    %v806 = vsub.s32 %v803, %v805
    %v807 = vrot.slane %v791, %v806
    %v809 = vunpack.c.l.s4 1966171168
    %v810 = vunpack.c.0.s8 %v809
    %v811 = vlaneseq
    %v812 = vshrl.u32 %v811, 7
    %v813 = vsub.s32 %v810, %v812
    %v814 = vrot.slane %v792, %v813
    %v816 = vunpack.c.l.s4 1966171168
    %v817 = vunpack.c.0.s8 %v816
    %v818 = vlaneseq
    %v819 = vshrl.u32 %v818, 7
    %v820 = vsub.s32 %v817, %v819
    %v821 = vrot.slane %v793, %v820
    %v822 = vcombine.low %v800, %v814
    %v823 = vcombine.low %v807, %v821
    %826 = vst [vmem:[#allocation15 + $0x10] sm:$0xff] %v822
    %827 = vst [vmem:[#allocation15 + $0x18] sm:$0xff] %v823
    %v828 = vmul.f32 %v471, %v581
    %v829 = vmul.f32 %v473, %v582
    %v830 = vmul.f32 %v475, %v583
    %v831 = vmul.f32 %v477, %v584
    %v832 = vmul.f32 %v479, %v585
    %v833 = vmul.f32 %v481, %v586
    %v834 = vmul.f32 %v483, %v587
    %v835 = vmul.f32 %v485, %v588
    %v836 = vmul.f32 %v487, %v664
    %v837 = vmul.f32 %v489, %v665
    %v838 = vmul.f32 %v491, %v666
    %v839 = vmul.f32 %v493, %v667
    %v840 = vmul.f32 %v495, %v668
    %v841 = vmul.f32 %v497, %v669
    %v842 = vmul.f32 %v499, %v670
    %v843 = vmul.f32 %v501, %v671
    %v844 = vsub.f32 %v828, %v836
    %v845 = vsub.f32 %v829, %v837
    %v846 = vsub.f32 %v830, %v838
    %v847 = vsub.f32 %v831, %v839
    %v848 = vsub.f32 %v832, %v840
    %v849 = vsub.f32 %v833, %v841
    %v850 = vsub.f32 %v834, %v842
    %v851 = vsub.f32 %v835, %v843
    %v860 = vcombine.low %v844, %v845
    %v861 = vcombine.low %v846, %v847
    %v862 = vcombine.low %v848, %v849
    %v863 = vcombine.low %v850, %v851
    %v865 = vunpack.c.l.s4 1966171168
    %v866 = vunpack.c.0.s8 %v865
    %v867 = vlaneseq
    %v868 = vshrl.u32 %v867, 7
    %v869 = vsub.s32 %v866, %v868
    %v870 = vrot.slane %v860, %v869
    %v872 = vunpack.c.l.s4 1966171168
    %v873 = vunpack.c.0.s8 %v872
    %v874 = vlaneseq
    %v875 = vshrl.u32 %v874, 7
    %v876 = vsub.s32 %v873, %v875
    %v877 = vrot.slane %v861, %v876
    %v879 = vunpack.c.l.s4 1966171168
    %v880 = vunpack.c.0.s8 %v879
    %v881 = vlaneseq
    %v882 = vshrl.u32 %v881, 7
    %v883 = vsub.s32 %v880, %v882
    %v884 = vrot.slane %v862, %v883
    %v886 = vunpack.c.l.s4 1966171168
    %v887 = vunpack.c.0.s8 %v886
    %v888 = vlaneseq
    %v889 = vshrl.u32 %v888, 7
    %v890 = vsub.s32 %v887, %v889
    %v891 = vrot.slane %v863, %v890
    %v892 = vcombine.low %v870, %v877
    %v893 = vcombine.high %v870, %v877
    %v894 = vcombine.low %v884, %v891
    %v895 = vcombine.high %v884, %v891
    %v897 = vunpack.c.l.s4 1966171168
    %v898 = vunpack.c.0.s8 %v897
    %v899 = vlaneseq
    %v900 = vshrl.u32 %v899, 7
    %v901 = vsub.s32 %v898, %v900
    %v902 = vrot.slane %v892, %v901
    %v904 = vunpack.c.l.s4 1966171168
    %v905 = vunpack.c.0.s8 %v904
    %v906 = vlaneseq
    %v907 = vshrl.u32 %v906, 7
    %v908 = vsub.s32 %v905, %v907
    %v909 = vrot.slane %v893, %v908
    %v911 = vunpack.c.l.s4 1966171168
    %v912 = vunpack.c.0.s8 %v911
    %v913 = vlaneseq
    %v914 = vshrl.u32 %v913, 7
    %v915 = vsub.s32 %v912, %v914
    %v916 = vrot.slane %v894, %v915
    %v918 = vunpack.c.l.s4 1966171168
    %v919 = vunpack.c.0.s8 %v918
    %v920 = vlaneseq
    %v921 = vshrl.u32 %v920, 7
    %v922 = vsub.s32 %v919, %v921
    %v923 = vrot.slane %v895, %v922
    %v924 = vcombine.low %v902, %v916
    %v925 = vcombine.low %v909, %v923
    %928 = vst [vmem:[#allocation16] sm:$0xff] %v924
    %929 = vst [vmem:[#allocation16 + $0x8] sm:$0xff] %v925
    %v930 = vmul.f32 %v471, %v664
    %v931 = vmul.f32 %v473, %v665
    %v932 = vmul.f32 %v475, %v666
    %v933 = vmul.f32 %v477, %v667
    %v934 = vmul.f32 %v479, %v668
    %v935 = vmul.f32 %v481, %v669
    %v936 = vmul.f32 %v483, %v670
    %v937 = vmul.f32 %v485, %v671
    %v938 = vmul.f32 %v487, %v581
    %v939 = vmul.f32 %v489, %v582
    %v940 = vmul.f32 %v491, %v583
    %v941 = vmul.f32 %v493, %v584
    %v942 = vmul.f32 %v495, %v585
    %v943 = vmul.f32 %v497, %v586
    %v944 = vmul.f32 %v499, %v587
    %v945 = vmul.f32 %v501, %v588
    %v946 = vadd.f32 %v930, %v938
    %v947 = vadd.f32 %v931, %v939
    %v948 = vadd.f32 %v932, %v940
    %v949 = vadd.f32 %v933, %v941
    %v950 = vadd.f32 %v934, %v942
    %v951 = vadd.f32 %v935, %v943
    %v952 = vadd.f32 %v936, %v944
    %v953 = vadd.f32 %v937, %v945
    %v962 = vcombine.low %v946, %v947
    %v963 = vcombine.low %v948, %v949
    %v964 = vcombine.low %v950, %v951
    %v965 = vcombine.low %v952, %v953
    %v967 = vunpack.c.l.s4 1966171168
    %v968 = vunpack.c.0.s8 %v967
    %v969 = vlaneseq
    %v970 = vshrl.u32 %v969, 7
    %v971 = vsub.s32 %v968, %v970
    %v972 = vrot.slane %v962, %v971
    %v974 = vunpack.c.l.s4 1966171168
    %v975 = vunpack.c.0.s8 %v974
    %v976 = vlaneseq
    %v977 = vshrl.u32 %v976, 7
    %v978 = vsub.s32 %v975, %v977
    %v979 = vrot.slane %v963, %v978
    %v981 = vunpack.c.l.s4 1966171168
    %v982 = vunpack.c.0.s8 %v981
    %v983 = vlaneseq
    %v984 = vshrl.u32 %v983, 7
    %v985 = vsub.s32 %v982, %v984
    %v986 = vrot.slane %v964, %v985
    %v988 = vunpack.c.l.s4 1966171168
    %v989 = vunpack.c.0.s8 %v988
    %v990 = vlaneseq
    %v991 = vshrl.u32 %v990, 7
    %v992 = vsub.s32 %v989, %v991
    %v993 = vrot.slane %v965, %v992
    %v994 = vcombine.low %v972, %v979
    %v995 = vcombine.high %v972, %v979
    %v996 = vcombine.low %v986, %v993
    %v997 = vcombine.high %v986, %v993
    %v999 = vunpack.c.l.s4 1966171168
    %v1000 = vunpack.c.0.s8 %v999
    %v1001 = vlaneseq
    %v1002 = vshrl.u32 %v1001, 7
    %v1003 = vsub.s32 %v1000, %v1002
    %v1004 = vrot.slane %v994, %v1003
    %v1006 = vunpack.c.l.s4 1966171168
    %v1007 = vunpack.c.0.s8 %v1006
    %v1008 = vlaneseq
    %v1009 = vshrl.u32 %v1008, 7
    %v1010 = vsub.s32 %v1007, %v1009
    %v1011 = vrot.slane %v995, %v1010
    %v1013 = vunpack.c.l.s4 1966171168
    %v1014 = vunpack.c.0.s8 %v1013
    %v1015 = vlaneseq
    %v1016 = vshrl.u32 %v1015, 7
    %v1017 = vsub.s32 %v1014, %v1016
    %v1018 = vrot.slane %v996, %v1017
    %v1020 = vunpack.c.l.s4 1966171168
    %v1021 = vunpack.c.0.s8 %v1020
    %v1022 = vlaneseq
    %v1023 = vshrl.u32 %v1022, 7
    %v1024 = vsub.s32 %v1021, %v1023
    %v1025 = vrot.slane %v997, %v1024
    %v1026 = vcombine.low %v1004, %v1018
    %v1027 = vcombine.low %v1011, %v1025
    %1030 = vst [vmem:[#allocation16 + $0x10] sm:$0xff] %v1026
    %1031 = vst [vmem:[#allocation16 + $0x18] sm:$0xff] %v1027
    %v1032 = vld [vmem:[#allocation10] ss:$2 sm:$0x3]
    %s1033 = scalar_lea.vmem [#allocation10], 4
    %v1034 = vld [vmem:[%s1033] ss:$2 sm:$0x3]
    %s1035 = scalar_lea.vmem [#allocation10], 8
    %v1036 = vld [vmem:[%s1035] ss:$2 sm:$0x3]
    %s1037 = scalar_lea.vmem [#allocation10], 12
    %v1038 = vld [vmem:[%s1037] ss:$2 sm:$0x3]
    %s1039 = scalar_lea.vmem [#allocation10], 16
    %v1040 = vld [vmem:[%s1039] ss:$2 sm:$0x3]
    %s1041 = scalar_lea.vmem [#allocation10], 20
    %v1042 = vld [vmem:[%s1041] ss:$2 sm:$0x3]
    %s1043 = scalar_lea.vmem [#allocation10], 24
    %v1044 = vld [vmem:[%s1043] ss:$2 sm:$0x3]
    %s1045 = scalar_lea.vmem [#allocation10], 28
    %v1046 = vld [vmem:[%s1045] ss:$2 sm:$0x3]
    %v1055 = vcombine.low %v1032, %v1034
    %v1056 = vcombine.low %v1036, %v1038
    %v1057 = vcombine.low %v1040, %v1042
    %v1058 = vcombine.low %v1044, %v1046
    %v1060 = vunpack.c.l.s4 1966171168
    %v1061 = vunpack.c.0.s8 %v1060
    %v1062 = vlaneseq
    %v1063 = vshrl.u32 %v1062, 7
    %v1064 = vsub.s32 %v1061, %v1063
    %v1065 = vrot.slane %v1055, %v1064
    %v1067 = vunpack.c.l.s4 1966171168
    %v1068 = vunpack.c.0.s8 %v1067
    %v1069 = vlaneseq
    %v1070 = vshrl.u32 %v1069, 7
    %v1071 = vsub.s32 %v1068, %v1070
    %v1072 = vrot.slane %v1056, %v1071
    %v1074 = vunpack.c.l.s4 1966171168
    %v1075 = vunpack.c.0.s8 %v1074
    %v1076 = vlaneseq
    %v1077 = vshrl.u32 %v1076, 7
    %v1078 = vsub.s32 %v1075, %v1077
    %v1079 = vrot.slane %v1057, %v1078
    %v1081 = vunpack.c.l.s4 1966171168
    %v1082 = vunpack.c.0.s8 %v1081
    %v1083 = vlaneseq
    %v1084 = vshrl.u32 %v1083, 7
    %v1085 = vsub.s32 %v1082, %v1084
    %v1086 = vrot.slane %v1058, %v1085
    %v1087 = vcombine.low %v1065, %v1072
    %v1088 = vcombine.high %v1065, %v1072
    %v1089 = vcombine.low %v1079, %v1086
    %v1090 = vcombine.high %v1079, %v1086
    %v1092 = vunpack.c.l.s4 1966171168
    %v1093 = vunpack.c.0.s8 %v1092
    %v1094 = vlaneseq
    %v1095 = vshrl.u32 %v1094, 7
    %v1096 = vsub.s32 %v1093, %v1095
    %v1097 = vrot.slane %v1087, %v1096
    %v1099 = vunpack.c.l.s4 1966171168
    %v1100 = vunpack.c.0.s8 %v1099
    %v1101 = vlaneseq
    %v1102 = vshrl.u32 %v1101, 7
    %v1103 = vsub.s32 %v1100, %v1102
    %v1104 = vrot.slane %v1088, %v1103
    %v1106 = vunpack.c.l.s4 1966171168
    %v1107 = vunpack.c.0.s8 %v1106
    %v1108 = vlaneseq
    %v1109 = vshrl.u32 %v1108, 7
    %v1110 = vsub.s32 %v1107, %v1109
    %v1111 = vrot.slane %v1089, %v1110
    %v1113 = vunpack.c.l.s4 1966171168
    %v1114 = vunpack.c.0.s8 %v1113
    %v1115 = vlaneseq
    %v1116 = vshrl.u32 %v1115, 7
    %v1117 = vsub.s32 %v1114, %v1116
    %v1118 = vrot.slane %v1090, %v1117
    %v1119 = vcombine.low %v1097, %v1111
    %v1120 = vcombine.low %v1104, %v1118
    %1123 = vst [vmem:[#allocation18] sm:$0xff] %v1119
    %1124 = vst [vmem:[#allocation18 + $0x8] sm:$0xff] %v1120
    %s1125 = scalar_lea.vmem [#allocation10], 1
    %v1126 = vld [vmem:[%s1125] ss:$2 sm:$0x3]
    %s1127 = scalar_lea.vmem [#allocation10], 5
    %v1128 = vld [vmem:[%s1127] ss:$2 sm:$0x3]
    %s1129 = scalar_lea.vmem [#allocation10], 9
    %v1130 = vld [vmem:[%s1129] ss:$2 sm:$0x3]
    %s1131 = scalar_lea.vmem [#allocation10], 13
    %v1132 = vld [vmem:[%s1131] ss:$2 sm:$0x3]
    %s1133 = scalar_lea.vmem [#allocation10], 17
    %v1134 = vld [vmem:[%s1133] ss:$2 sm:$0x3]
    %s1135 = scalar_lea.vmem [#allocation10], 21
    %v1136 = vld [vmem:[%s1135] ss:$2 sm:$0x3]
    %s1137 = scalar_lea.vmem [#allocation10], 25
    %v1138 = vld [vmem:[%s1137] ss:$2 sm:$0x3]
    %s1139 = scalar_lea.vmem [#allocation10], 29
    %v1140 = vld [vmem:[%s1139] ss:$2 sm:$0x3]
    %v1149 = vcombine.low %v1126, %v1128
    %v1150 = vcombine.low %v1130, %v1132
    %v1151 = vcombine.low %v1134, %v1136
    %v1152 = vcombine.low %v1138, %v1140
    %v1154 = vunpack.c.l.s4 1966171168
    %v1155 = vunpack.c.0.s8 %v1154
    %v1156 = vlaneseq
    %v1157 = vshrl.u32 %v1156, 7
    %v1158 = vsub.s32 %v1155, %v1157
    %v1159 = vrot.slane %v1149, %v1158
    %v1161 = vunpack.c.l.s4 1966171168
    %v1162 = vunpack.c.0.s8 %v1161
    %v1163 = vlaneseq
    %v1164 = vshrl.u32 %v1163, 7
    %v1165 = vsub.s32 %v1162, %v1164
    %v1166 = vrot.slane %v1150, %v1165
    %v1168 = vunpack.c.l.s4 1966171168
    %v1169 = vunpack.c.0.s8 %v1168
    %v1170 = vlaneseq
    %v1171 = vshrl.u32 %v1170, 7
    %v1172 = vsub.s32 %v1169, %v1171
    %v1173 = vrot.slane %v1151, %v1172
    %v1175 = vunpack.c.l.s4 1966171168
    %v1176 = vunpack.c.0.s8 %v1175
    %v1177 = vlaneseq
    %v1178 = vshrl.u32 %v1177, 7
    %v1179 = vsub.s32 %v1176, %v1178
    %v1180 = vrot.slane %v1152, %v1179
    %v1181 = vcombine.low %v1159, %v1166
    %v1182 = vcombine.high %v1159, %v1166
    %v1183 = vcombine.low %v1173, %v1180
    %v1184 = vcombine.high %v1173, %v1180
    %v1186 = vunpack.c.l.s4 1966171168
    %v1187 = vunpack.c.0.s8 %v1186
    %v1188 = vlaneseq
    %v1189 = vshrl.u32 %v1188, 7
    %v1190 = vsub.s32 %v1187, %v1189
    %v1191 = vrot.slane %v1181, %v1190
    %v1193 = vunpack.c.l.s4 1966171168
    %v1194 = vunpack.c.0.s8 %v1193
    %v1195 = vlaneseq
    %v1196 = vshrl.u32 %v1195, 7
    %v1197 = vsub.s32 %v1194, %v1196
    %v1198 = vrot.slane %v1182, %v1197
    %v1200 = vunpack.c.l.s4 1966171168
    %v1201 = vunpack.c.0.s8 %v1200
    %v1202 = vlaneseq
    %v1203 = vshrl.u32 %v1202, 7
    %v1204 = vsub.s32 %v1201, %v1203
    %v1205 = vrot.slane %v1183, %v1204
    %v1207 = vunpack.c.l.s4 1966171168
    %v1208 = vunpack.c.0.s8 %v1207
    %v1209 = vlaneseq
    %v1210 = vshrl.u32 %v1209, 7
    %v1211 = vsub.s32 %v1208, %v1210
    %v1212 = vrot.slane %v1184, %v1211
    %v1213 = vcombine.low %v1191, %v1205
    %v1214 = vcombine.low %v1198, %v1212
    %1217 = vst [vmem:[#allocation18 + $0x10] sm:$0xff] %v1213
    %1218 = vst [vmem:[#allocation18 + $0x18] sm:$0xff] %v1214
    // Predicated region
    $region66: #{tpu_custom_call.1} parent=1 // pred_check
      _
    $region67: #{tpu_custom_call.1} parent=1 // pred_check_branch
      %1220 = sbr.rel (0) target = $region69
    $region68: #{tpu_custom_call.1} parent=1 // pred_region
      %s1222 = ssub.s32 512, 512
      %1223 = vsyncadd [#allocation4], %s1222
      %s1225 = sshll.u32 [#allocation15], 4
      %s1226 = int_to_ptr.vmem [resolvable:$true] %s1225
      %1228 = dma.vmem_to_hbm [thread:$0]  %s1226, 512, %s9, [#allocation4]
    $region69: #{tpu_custom_call.1} parent=1 // pred_fallthru
      _
    // Predicated region
    $region70: #{tpu_custom_call.1} parent=1 // pred_check
      _
    $region71: #{tpu_custom_call.1} parent=1 // pred_check_branch
      %1230 = sbr.rel (0) target = $region73
    $region72: #{tpu_custom_call.1} parent=1 // pred_region
      %s1232 = ssub.s32 512, 512
      %1233 = vsyncadd [#allocation17], %s1232
      %s1235 = sshll.u32 [#allocation16], 4
      %s1236 = int_to_ptr.vmem [resolvable:$true] %s1235
      %1238 = dma.vmem_to_hbm [thread:$0]  %s1236, 512, %s10, [#allocation17]
    $region73: #{tpu_custom_call.1} parent=1 // pred_fallthru
      _
    // Predicated region
    $region74: #{tpu_custom_call.1} parent=1 // pred_check
      _
    $region75: #{tpu_custom_call.1} parent=1 // pred_check_branch
      %1240 = sbr.rel (0) target = $region77
    $region76: #{tpu_custom_call.1} parent=1 // pred_region
      %s1242 = ssub.s32 512, 512
      %1243 = vsyncadd [#allocation17], %s1242
      %s1245 = sshll.u32 [#allocation18], 4
      %s1246 = int_to_ptr.vmem [resolvable:$true] %s1245
      %1248 = dma.vmem_to_hbm [thread:$0]  %s1246, 512, %s11, [#allocation17]
    $region77: #{tpu_custom_call.1} parent=1 // pred_fallthru
      _
    // Predicated region
    $region78: #{tpu_custom_call.1} parent=1 // pred_check
      _
    $region79: #{tpu_custom_call.1} parent=1 // pred_check_branch
      %1250 = sbr.rel (0) target = $region81
    $region80: #{tpu_custom_call.1} parent=1 // pred_region
      %1251 = dma.done [#allocation4], 512
    $region81: #{tpu_custom_call.1} parent=1 // pred_fallthru
      _
    // Predicated region
    $region82: #{tpu_custom_call.1} parent=1 // pred_check
      _
    $region83: #{tpu_custom_call.1} parent=1 // pred_check_branch
      %1253 = sbr.rel (0) target = $region85
    $region84: #{tpu_custom_call.1} parent=1 // pred_region
      %1254 = dma.done [#allocation17], 512
    $region85: #{tpu_custom_call.1} parent=1 // pred_fallthru
      _
    // Predicated region
    $region86: #{tpu_custom_call.1} parent=1 // pred_check
      _
    $region87: #{tpu_custom_call.1} parent=1 // pred_check_branch
      %1256 = sbr.rel (0) target = $region89
    $region88: #{tpu_custom_call.1} parent=1 // pred_region
      %1257 = dma.done [#allocation17], 512
    $region89: #{tpu_custom_call.1} parent=1 // pred_fallthru
      _
    %1258 = vsyncpa [#allocation3], 1
    %1259 = vsyncpa [#allocation7], 1
    %1260 = vsyncpa [#allocation11], 1
    %1261 = vsyncpa [#allocation4], 1
    %1262 = vsyncpa [#allocation17], 1
    %1263 = vsyncpa [#allocation5], 1
    %1264 = vsyncpa [#allocation13], 1

</llo_original>
